<compile_context>
chip_gen: v7x
topology: tpu7x:2x2x1
jax: 0.10.0
libtpu: 0.0.40
codegen_flags: <defaults>
</compile_context>

<pallas_src>
import numpy as np
import jax
import jax.numpy as jnp
from jax.experimental import pallas as pl
from jax.experimental.pallas import tpu as pltpu


# ----------------------------- Pallas kernel --------------------------------
def q_conv2d_kernel(x_ref, bhi_ref, blo_ref, ehi_ref, elo_ref, a_ref, o_ref):
    """x_ref:   (NQ, TP)   f32   patch embedding angles (patch axis on lanes)
       bhi_ref: (Dhi, nh)  f32   bit q of the high half-index (0/1)
       blo_ref: (Dlo, nl)  f32   bit q of the low  half-index (0/1)
       ehi_ref: (D, Dhi)   bf16  0/1 expansion: ehi[b, h] = (b >> nl == h)
       elo_ref: (D, Dlo)   bf16  0/1 expansion: elo[b, l] = (b & (Dlo-1) == l)
       a_ref:   (OC*D, D)  bf16  stacked folded observables [A_0; A_1; ...]
       o_ref:   (OC, TP)   f32   <Z_last> per output channel and patch"""
    Dhi, nh = bhi_ref.shape
    Dlo, nl = blo_ref.shape
    D = ehi_ref.shape[0]
    OC = a_ref.shape[0] // D

    half = x_ref[...] * 0.5
    cos_h = jnp.cos(half)                      # (NQ, TP) -- EUP, lane-dense
    sin_h = jnp.sin(half)

    def half_product(bits_ref, n_half, wire0):
        """Product over n_half qubits of (cos or sin), patch axis on lanes."""
        prod = None
        for qi in range(n_half):               # small & static -> unrolled
            w = wire0 + qi
            bq = bits_ref[:, qi:qi + 1]                                      # (Dh, 1)
            fq = jnp.where(bq > 0.5, sin_h[w:w + 1, :], cos_h[w:w + 1, :])   # (Dh, TP)
            prod = fq if prod is None else prod * fq
        return prod

    v_hi = half_product(bhi_ref, nh, 0)        # (Dhi, TP)
    v_lo = half_product(blo_ref, nl, nh)       # (Dlo, TP)

    # Expand half-products to full width on the MXU (0/1 matrices, bf16 exact
    # on the 0/1 side) and combine with a single lane-dense multiply:
    #   v[b, p] = v_hi[b >> nl, p] * v_lo[b & (Dlo-1), p]
    v = (jnp.dot(ehi_ref[...], v_hi.astype(jnp.bfloat16),
                 preferred_element_type=jnp.float32) *
         jnp.dot(elo_ref[...], v_lo.astype(jnp.bfloat16),
                 preferred_element_type=jnp.float32))                        # (D, TP) f32

    # One fused bf16 MXU matmul against all output channels, f32 accumulation.
    y = jnp.dot(a_ref[...], v.astype(jnp.bfloat16),
                preferred_element_type=jnp.float32)                          # (OC*D, TP)

    # Quadratic form per channel: <Z_last>_c = colsum(v * y_c) over the D
    # (sublane) axis; build the whole (OC, TP) block and store it ONCE.
    rows = []
    for c in range(OC):
        yc = y[c * D:(c + 1) * D, :]
        rows.append(jnp.sum(v * yc, axis=0, keepdims=True))                 # (1, TP)
    o_ref[...] = jnp.concatenate(rows, axis=0)                              # (OC, TP)


# ------------------------------ glue (JAX) ----------------------------------
def extract_patches(x, k, s):
    """x.unfold(2,k,s).unfold(3,k,s) + rearrange 'b c h w i j -> b h w (c i j)'
    as a single reshape (non-overlapping) or one gather (general), loop-free."""
    B, C, H, W = x.shape
    Ho = (H - k) // s + 1
    Wo = (W - k) // s + 1
    if s == k and H == Ho * k and W == Wo * k:
        p = x.reshape(B, C, Ho, k, Wo, k)
    else:
        hi = (jnp.arange(Ho)[:, None] * s + jnp.arange(k)[None, :]).reshape(-1)
        wi = (jnp.arange(Wo)[:, None] * s + jnp.arange(k)[None, :]).reshape(-1)
        p = x[:, :, hi, :][:, :, :, wi].reshape(B, C, Ho, k, Wo, k)
    p = jnp.transpose(p, (0, 2, 4, 1, 3, 5))              # b h w c i j
    return p.reshape(B, Ho, Wo, C * k * k), Ho, Wo


def build_channel_matrices(weights_all, n):
    """Fold BasicEntanglerLayers weights into real symmetric D x D matrices A_c
    such that <Z_last> = v^T A_c v for the real product vector v (param setup)."""
    D = 2 ** n

    def rx_mat(theta):
        c, s = np.cos(theta / 2.0), np.sin(theta / 2.0)
        return np.array([[c, -1j * s], [-1j * s, c]], dtype=np.complex128)

    def cnot_mat(ctrl, tgt):
        idx = np.arange(D)
        cb, tb = n - 1 - ctrl, n - 1 - tgt              # wire 0 = MSB
        new = np.where(((idx >> cb) & 1) == 1, idx ^ (1 << tb), idx)
        m = np.zeros((D, D), dtype=np.complex128)
        m[new, idx] = 1.0
        return m

    ring = np.eye(D, dtype=np.complex128)
    if n == 2:
        ring = cnot_mat(0, 1)
    elif n > 2:
        for i in range(n):
            ring = cnot_mat(i, (i + 1) % n) @ ring

    z_last = np.where((np.arange(D) & 1) == 0, 1.0, -1.0)
    pop = np.array([bin(b).count("1") for b in range(D)])
    phase = (-1j) ** pop                                 # |psi> = diag(phase) v

    mats = []
    for wch in weights_all:                              # (L, n)
        U = np.eye(D, dtype=np.complex128)
        for l in range(wch.shape[0]):
            layer = np.array([[1.0 + 0j]])
            for q in range(n):
                layer = np.kron(layer, rx_mat(wch[l, q]))
            U = ring @ layer @ U
        M = U.conj().T @ (z_last[:, None] * U)           # U^dag Z_last U
        Mp = np.conj(phase)[:, None] * M * phase[None, :]
        mats.append(np.real(Mp))
    return np.stack(mats).astype(np.float32)


def _round_up(a, m):
    return ((a + m - 1) // m) * m


def q_conv2d(x, weights, kernel_size, stride):
    B, C, H, W = x.shape
    OC, L, NQ = weights.shape
    assert NQ == kernel_size ** 2 * C
    assert NQ >= 2
    D = 1 << NQ
    nh = NQ // 2
    nl = NQ - nh
    Dhi, Dlo = 1 << nh, 1 << nl

    angles4, Ho, Wo = extract_patches(x, kernel_size, stride)
    P = B * Ho * Wo
    # TODO(synk): for stride < kernel_size at very large spatial sizes, gather
    # patches inside the kernel (PrefetchScalarGridSpec row offsets) to avoid
    # materializing the (k/s)^2-inflated patch matrix in HBM.
    angles = jnp.transpose(angles4.reshape(P, NQ).astype(jnp.float32))   # (NQ, P)

    # ---- weight-only parameter folding (numpy, once) ----
    A = build_channel_matrices(np.asarray(weights), NQ)                  # (OC, D, D)
    a_cat = jnp.asarray(A.reshape(OC * D, D), dtype=jnp.bfloat16)        # bf16 MXU operand

    hi_idx, lo_idx, b_idx = np.arange(Dhi), np.arange(Dlo), np.arange(D)
    bits_hi = np.stack([(hi_idx >> (nh - 1 - q)) & 1
                        for q in range(nh)], axis=1).astype(np.float32)  # (Dhi, nh)
    bits_lo = np.stack([(lo_idx >> (nl - 1 - q)) & 1
                        for q in range(nl)], axis=1).astype(np.float32)  # (Dlo, nl)
    e_hi = ((b_idx[:, None] >> nl) == hi_idx[None, :]).astype(np.float32)        # (D, Dhi)
    e_lo = ((b_idx[:, None] & (Dlo - 1)) == lo_idx[None, :]).astype(np.float32)  # (D, Dlo)

    # Patch tile = lane width of every block.  Big tiles amortize the ~600-cycle
    # grid-step overhead; keep >= 2 steps whenever P allows so both v7x
    # TensorCores get work through the "parallel" grid axis; multiples of 256
    # fill whole 256-wide MXU passes on v6e/v7x (128 would suffice on v5e).
    if P <= 128:
        TP = 128
    elif P <= 2048:
        TP = max(256, _round_up((P + 1) // 2, 256))
    else:
        TP = 1024
    P_pad = _round_up(P, TP)
    if P_pad != P:
        angles = jnp.pad(angles, ((0, 0), (0, P_pad - P)))   # zero angles -> harmless

    cost = pl.CostEstimate(
        flops=int(2 * P_pad * D * (OC * D)            # fused quadratic-form matmul
                  + 2 * P_pad * D * (Dhi + Dlo)       # half-product expansion matmuls
                  + 3 * P_pad * OC * D),              # elementwise mul + colsum
        transcendentals=int(2 * P_pad * NQ),
        bytes_accessed=int(4 * P_pad * NQ + 2 * OC * D * D + 4 * P_pad * OC),
    )

    out = pl.pallas_call(
        q_conv2d_kernel,
        out_shape=jax.ShapeDtypeStruct((OC, P_pad), jnp.float32),
        grid=(P_pad // TP,),
        in_specs=[
            pl.BlockSpec((NQ, TP), lambda i: (0, i)),
            pl.BlockSpec((Dhi, nh), lambda i: (0, 0)),
            pl.BlockSpec((Dlo, nl), lambda i: (0, 0)),
            pl.BlockSpec((D, Dhi), lambda i: (0, 0)),
            pl.BlockSpec((D, Dlo), lambda i: (0, 0)),
            # Constant-index block: DMA'd once, VMEM-resident across grid steps.
            # For much larger NQ (D >= 2048) stream A in (D, D) blocks via an
            # extra grid axis or memory_space=pl.ANY + manual DMA, and raise
            # vmem_limit_bytes -- needed on v7x (64 MiB VMEM).  At D = 256 the
            # whole stack is ~0.4 MiB and fits everywhere.
            pl.BlockSpec((OC * D, D), lambda i: (0, 0)),
        ],
        out_specs=pl.BlockSpec((OC, TP), lambda i: (0, i)),
        compiler_params=pltpu.CompilerParams(dimension_semantics=("parallel",)),
        cost_estimate=cost,
    )(angles, jnp.asarray(bits_hi), jnp.asarray(bits_lo),
      jnp.asarray(e_hi, dtype=jnp.bfloat16), jnp.asarray(e_lo, dtype=jnp.bfloat16),
      a_cat)

    out = out[:, :P].reshape(OC, B, Ho, Wo)
    return jnp.transpose(out, (1, 0, 2, 3))   # (B, OC, Ho, Wo) like torch.stack(dim=1)


# ------------------------ independent numpy reference ------------------------
def ref_qcircuit_expval(angles, wlayer):
    n = angles.shape[0]
    psi = np.zeros((2,) * n, dtype=np.complex128)
    psi[(0,) * n] = 1.0

    def rx(theta, q, st):
        c, s = np.cos(theta / 2.0), np.sin(theta / 2.0)
        m = np.array([[c, -1j * s], [-1j * s, c]])
        st = np.tensordot(m, st, axes=([1], [q]))
        return np.moveaxis(st, 0, q)

    def cnot(c, t, st):
        st = st.copy()
        sel = [slice(None)] * n
        sel[c] = 1
        sub = st[tuple(sel)]
        t2 = t if t < c else t - 1
        st[tuple(sel)] = np.flip(sub, axis=t2)
        return st

    for q in range(n):
        psi = rx(angles[q], q, psi)                      # AngleEmbedding (RX)
    for l in range(wlayer.shape[0]):                     # BasicEntanglerLayers
        for q in range(n):
            psi = rx(wlayer[l, q], q, psi)
        if n == 2:
            psi = cnot(0, 1, psi)
        elif n > 2:
            for q in range(n):
                psi = cnot(q, (q + 1) % n, psi)
    probs = np.abs(psi) ** 2
    return float(np.sum(probs[..., 0]) - np.sum(probs[..., 1]))   # <Z> on last wire


if __name__ == "__main__":
    B, C, H, W = 2, 2, 8, 8
    kernel_size, stride = 2, 2
    out_channels = 3
    NQ = kernel_size ** 2 * C        # num_qubits = 8  -> D = 256
    L = kernel_size ** 2             # num_layers = 4

    key = jax.random.PRNGKey(0)
    kx, kw = jax.random.split(key)
    x = jax.random.normal(kx, (B, C, H, W), dtype=jnp.float32)
    weights = jax.random.uniform(kw, (out_channels, L, NQ), dtype=jnp.float32,
                                 minval=0.0, maxval=2.0 * np.pi)

    out = q_conv2d(x, weights, kernel_size, stride)
    out = jax.block_until_ready(out)

    # Validate against a gate-by-gate statevector simulation.
    patches, Ho, Wo = extract_patches(x, kernel_size, stride)
    ang_np = np.asarray(patches).reshape(-1, NQ).astype(np.float64)
    w_np = np.asarray(weights).astype(np.float64)
    ref = np.zeros((ang_np.shape[0], out_channels))
    for p in range(ang_np.shape[0]):
        for c in range(out_channels):
            ref[p, c] = ref_qcircuit_expval(ang_np[p], w_np[c])
    ref = ref.reshape(B, Ho, Wo, out_channels).transpose(0, 3, 1, 2)

    assert out.shape == (B, out_channels, Ho, Wo)
    # Tolerance 1e-2: the expansion dots and the fused quadratic-form matmul
    # run with bf16 MXU inputs (f32 accumulation); |v|_2 = 1 and ||A_c|| <= 1
    # bound the absolute error well below this in practice.
    np.testing.assert_allclose(np.asarray(out), ref, atol=1e-2, rtol=1e-2)
    print("KERNEL_OK")
</pallas_src>

<mosaic_0001>
module attributes {stable_mosaic.version = 11 : i64} {
  func.func @q_conv2d_kernel(%arg0: i32, %arg1: memref<8x128xf32, #tpu.memory_space<vmem>>, %arg2: memref<16x4xf32, #tpu.memory_space<vmem>>, %arg3: memref<16x4xf32, #tpu.memory_space<vmem>>, %arg4: memref<256x16xbf16, #tpu.memory_space<vmem>>, %arg5: memref<256x16xbf16, #tpu.memory_space<vmem>>, %arg6: memref<768x256xbf16, #tpu.memory_space<vmem>>, %arg7: memref<3x128xf32, #tpu.memory_space<vmem>>) attributes {dimension_semantics = [#tpu.dimension_semantics<parallel>], iteration_bounds = array<i64: 1>, scalar_prefetch = 0 : i64, scratch_operands = 0 : i64, tpu.core_type = #tpu.core_type<tc>, window_params = [{transform_indices = @transform_0, window_bounds = array<i64: 8, 128>}, {pipeline_mode = #tpu.pipeline_mode<synchronous>, transform_indices = @transform_1, window_bounds = array<i64: 16, 4>}, {pipeline_mode = #tpu.pipeline_mode<synchronous>, transform_indices = @transform_2, window_bounds = array<i64: 16, 4>}, {pipeline_mode = #tpu.pipeline_mode<synchronous>, transform_indices = @transform_3, window_bounds = array<i64: 256, 16>}, {pipeline_mode = #tpu.pipeline_mode<synchronous>, transform_indices = @transform_4, window_bounds = array<i64: 256, 16>}, {pipeline_mode = #tpu.pipeline_mode<synchronous>, transform_indices = @transform_5, window_bounds = array<i64: 768, 256>}, {transform_indices = @transform_6, window_bounds = array<i64: 3, 128>}]} {
    %c0 = arith.constant 0 : index
    %c0_0 = arith.constant 0 : index
    %0 = vector.load %arg1[%c0, %c0_0] : memref<8x128xf32, #tpu.memory_space<vmem>>, vector<8x128xf32>
    %cst = arith.constant 5.000000e-01 : f32
    %1 = vector.broadcast %cst : f32 to vector<8x128xf32>
    %2 = arith.mulf %0, %1 : vector<8x128xf32>
    %3 = math.cos %2 : vector<8x128xf32>
    %4 = math.sin %2 : vector<8x128xf32>
    %c0_1 = arith.constant 0 : index
    %c0_2 = arith.constant 0 : index
    %5 = vector.load %arg2[%c0_1, %c0_2] : memref<16x4xf32, #tpu.memory_space<vmem>>, vector<16x1xf32>
    %cst_3 = arith.constant 5.000000e-01 : f32
    %6 = vector.broadcast %cst_3 : f32 to vector<16x1xf32>
    %7 = arith.cmpf ogt, %5, %6 : vector<16x1xf32>
    %8 = vector.extract_strided_slice %4 {offsets = [0, 0], sizes = [1, 128], strides = [1, 1]} : vector<8x128xf32> to vector<1x128xf32>
    %9 = vector.extract_strided_slice %3 {offsets = [0, 0], sizes = [1, 128], strides = [1, 1]} : vector<8x128xf32> to vector<1x128xf32>
    %10 = vector.shape_cast %7 : vector<16x1xi1> to vector<16x1xi1>
    %11 = vector.broadcast %10 : vector<16x1xi1> to vector<16x128xi1>
    %12 = vector.shape_cast %8 : vector<1x128xf32> to vector<1x128xf32>
    %13 = vector.broadcast %12 : vector<1x128xf32> to vector<16x128xf32>
    %14 = vector.shape_cast %9 : vector<1x128xf32> to vector<1x128xf32>
    %15 = vector.broadcast %14 : vector<1x128xf32> to vector<16x128xf32>
    %16 = arith.select %11, %13, %15 : vector<16x128xi1>, vector<16x128xf32>
    %c0_4 = arith.constant 0 : index
    %c1 = arith.constant 1 : index
    %17 = vector.load %arg2[%c0_4, %c1] : memref<16x4xf32, #tpu.memory_space<vmem>>, vector<16x1xf32>
    %cst_5 = arith.constant 5.000000e-01 : f32
    %18 = vector.broadcast %cst_5 : f32 to vector<16x1xf32>
    %19 = arith.cmpf ogt, %17, %18 : vector<16x1xf32>
    %20 = vector.extract_strided_slice %4 {offsets = [1, 0], sizes = [1, 128], strides = [1, 1]} : vector<8x128xf32> to vector<1x128xf32>
    %21 = vector.extract_strided_slice %3 {offsets = [1, 0], sizes = [1, 128], strides = [1, 1]} : vector<8x128xf32> to vector<1x128xf32>
    %22 = vector.shape_cast %19 : vector<16x1xi1> to vector<16x1xi1>
    %23 = vector.broadcast %22 : vector<16x1xi1> to vector<16x128xi1>
    %24 = vector.shape_cast %20 : vector<1x128xf32> to vector<1x128xf32>
    %25 = vector.broadcast %24 : vector<1x128xf32> to vector<16x128xf32>
    %26 = vector.shape_cast %21 : vector<1x128xf32> to vector<1x128xf32>
    %27 = vector.broadcast %26 : vector<1x128xf32> to vector<16x128xf32>
    %28 = arith.select %23, %25, %27 : vector<16x128xi1>, vector<16x128xf32>
    %29 = arith.mulf %16, %28 : vector<16x128xf32>
    %c0_6 = arith.constant 0 : index
    %c2 = arith.constant 2 : index
    %30 = vector.load %arg2[%c0_6, %c2] : memref<16x4xf32, #tpu.memory_space<vmem>>, vector<16x1xf32>
    %cst_7 = arith.constant 5.000000e-01 : f32
    %31 = vector.broadcast %cst_7 : f32 to vector<16x1xf32>
    %32 = arith.cmpf ogt, %30, %31 : vector<16x1xf32>
    %33 = vector.extract_strided_slice %4 {offsets = [2, 0], sizes = [1, 128], strides = [1, 1]} : vector<8x128xf32> to vector<1x128xf32>
    %34 = vector.extract_strided_slice %3 {offsets = [2, 0], sizes = [1, 128], strides = [1, 1]} : vector<8x128xf32> to vector<1x128xf32>
    %35 = vector.shape_cast %32 : vector<16x1xi1> to vector<16x1xi1>
    %36 = vector.broadcast %35 : vector<16x1xi1> to vector<16x128xi1>
    %37 = vector.shape_cast %33 : vector<1x128xf32> to vector<1x128xf32>
    %38 = vector.broadcast %37 : vector<1x128xf32> to vector<16x128xf32>
    %39 = vector.shape_cast %34 : vector<1x128xf32> to vector<1x128xf32>
    %40 = vector.broadcast %39 : vector<1x128xf32> to vector<16x128xf32>
    %41 = arith.select %36, %38, %40 : vector<16x128xi1>, vector<16x128xf32>
    %42 = arith.mulf %29, %41 : vector<16x128xf32>
    %c0_8 = arith.constant 0 : index
    %c3 = arith.constant 3 : index
    %43 = vector.load %arg2[%c0_8, %c3] : memref<16x4xf32, #tpu.memory_space<vmem>>, vector<16x1xf32>
    %cst_9 = arith.constant 5.000000e-01 : f32
    %44 = vector.broadcast %cst_9 : f32 to vector<16x1xf32>
    %45 = arith.cmpf ogt, %43, %44 : vector<16x1xf32>
    %46 = vector.extract_strided_slice %4 {offsets = [3, 0], sizes = [1, 128], strides = [1, 1]} : vector<8x128xf32> to vector<1x128xf32>
    %47 = vector.extract_strided_slice %3 {offsets = [3, 0], sizes = [1, 128], strides = [1, 1]} : vector<8x128xf32> to vector<1x128xf32>
    %48 = vector.shape_cast %45 : vector<16x1xi1> to vector<16x1xi1>
    %49 = vector.broadcast %48 : vector<16x1xi1> to vector<16x128xi1>
    %50 = vector.shape_cast %46 : vector<1x128xf32> to vector<1x128xf32>
    %51 = vector.broadcast %50 : vector<1x128xf32> to vector<16x128xf32>
    %52 = vector.shape_cast %47 : vector<1x128xf32> to vector<1x128xf32>
    %53 = vector.broadcast %52 : vector<1x128xf32> to vector<16x128xf32>
    %54 = arith.select %49, %51, %53 : vector<16x128xi1>, vector<16x128xf32>
    %55 = arith.mulf %42, %54 : vector<16x128xf32>
    %c0_10 = arith.constant 0 : index
    %c0_11 = arith.constant 0 : index
    %56 = vector.load %arg3[%c0_10, %c0_11] : memref<16x4xf32, #tpu.memory_space<vmem>>, vector<16x1xf32>
    %cst_12 = arith.constant 5.000000e-01 : f32
    %57 = vector.broadcast %cst_12 : f32 to vector<16x1xf32>
    %58 = arith.cmpf ogt, %56, %57 : vector<16x1xf32>
    %59 = vector.extract_strided_slice %4 {offsets = [4, 0], sizes = [1, 128], strides = [1, 1]} : vector<8x128xf32> to vector<1x128xf32>
    %60 = vector.extract_strided_slice %3 {offsets = [4, 0], sizes = [1, 128], strides = [1, 1]} : vector<8x128xf32> to vector<1x128xf32>
    %61 = vector.shape_cast %58 : vector<16x1xi1> to vector<16x1xi1>
    %62 = vector.broadcast %61 : vector<16x1xi1> to vector<16x128xi1>
    %63 = vector.shape_cast %59 : vector<1x128xf32> to vector<1x128xf32>
    %64 = vector.broadcast %63 : vector<1x128xf32> to vector<16x128xf32>
    %65 = vector.shape_cast %60 : vector<1x128xf32> to vector<1x128xf32>
    %66 = vector.broadcast %65 : vector<1x128xf32> to vector<16x128xf32>
    %67 = arith.select %62, %64, %66 : vector<16x128xi1>, vector<16x128xf32>
    %c0_13 = arith.constant 0 : index
    %c1_14 = arith.constant 1 : index
    %68 = vector.load %arg3[%c0_13, %c1_14] : memref<16x4xf32, #tpu.memory_space<vmem>>, vector<16x1xf32>
    %cst_15 = arith.constant 5.000000e-01 : f32
    %69 = vector.broadcast %cst_15 : f32 to vector<16x1xf32>
    %70 = arith.cmpf ogt, %68, %69 : vector<16x1xf32>
    %71 = vector.extract_strided_slice %4 {offsets = [5, 0], sizes = [1, 128], strides = [1, 1]} : vector<8x128xf32> to vector<1x128xf32>
    %72 = vector.extract_strided_slice %3 {offsets = [5, 0], sizes = [1, 128], strides = [1, 1]} : vector<8x128xf32> to vector<1x128xf32>
    %73 = vector.shape_cast %70 : vector<16x1xi1> to vector<16x1xi1>
    %74 = vector.broadcast %73 : vector<16x1xi1> to vector<16x128xi1>
    %75 = vector.shape_cast %71 : vector<1x128xf32> to vector<1x128xf32>
    %76 = vector.broadcast %75 : vector<1x128xf32> to vector<16x128xf32>
    %77 = vector.shape_cast %72 : vector<1x128xf32> to vector<1x128xf32>
    %78 = vector.broadcast %77 : vector<1x128xf32> to vector<16x128xf32>
    %79 = arith.select %74, %76, %78 : vector<16x128xi1>, vector<16x128xf32>
    %80 = arith.mulf %67, %79 : vector<16x128xf32>
    %c0_16 = arith.constant 0 : index
    %c2_17 = arith.constant 2 : index
    %81 = vector.load %arg3[%c0_16, %c2_17] : memref<16x4xf32, #tpu.memory_space<vmem>>, vector<16x1xf32>
    %cst_18 = arith.constant 5.000000e-01 : f32
    %82 = vector.broadcast %cst_18 : f32 to vector<16x1xf32>
    %83 = arith.cmpf ogt, %81, %82 : vector<16x1xf32>
    %84 = vector.extract_strided_slice %4 {offsets = [6, 0], sizes = [1, 128], strides = [1, 1]} : vector<8x128xf32> to vector<1x128xf32>
    %85 = vector.extract_strided_slice %3 {offsets = [6, 0], sizes = [1, 128], strides = [1, 1]} : vector<8x128xf32> to vector<1x128xf32>
    %86 = vector.shape_cast %83 : vector<16x1xi1> to vector<16x1xi1>
    %87 = vector.broadcast %86 : vector<16x1xi1> to vector<16x128xi1>
    %88 = vector.shape_cast %84 : vector<1x128xf32> to vector<1x128xf32>
    %89 = vector.broadcast %88 : vector<1x128xf32> to vector<16x128xf32>
    %90 = vector.shape_cast %85 : vector<1x128xf32> to vector<1x128xf32>
    %91 = vector.broadcast %90 : vector<1x128xf32> to vector<16x128xf32>
    %92 = arith.select %87, %89, %91 : vector<16x128xi1>, vector<16x128xf32>
    %93 = arith.mulf %80, %92 : vector<16x128xf32>
    %c0_19 = arith.constant 0 : index
    %c3_20 = arith.constant 3 : index
    %94 = vector.load %arg3[%c0_19, %c3_20] : memref<16x4xf32, #tpu.memory_space<vmem>>, vector<16x1xf32>
    %cst_21 = arith.constant 5.000000e-01 : f32
    %95 = vector.broadcast %cst_21 : f32 to vector<16x1xf32>
    %96 = arith.cmpf ogt, %94, %95 : vector<16x1xf32>
    %97 = vector.extract_strided_slice %4 {offsets = [7, 0], sizes = [1, 128], strides = [1, 1]} : vector<8x128xf32> to vector<1x128xf32>
    %98 = vector.extract_strided_slice %3 {offsets = [7, 0], sizes = [1, 128], strides = [1, 1]} : vector<8x128xf32> to vector<1x128xf32>
    %99 = vector.shape_cast %96 : vector<16x1xi1> to vector<16x1xi1>
    %100 = vector.broadcast %99 : vector<16x1xi1> to vector<16x128xi1>
    %101 = vector.shape_cast %97 : vector<1x128xf32> to vector<1x128xf32>
    %102 = vector.broadcast %101 : vector<1x128xf32> to vector<16x128xf32>
    %103 = vector.shape_cast %98 : vector<1x128xf32> to vector<1x128xf32>
    %104 = vector.broadcast %103 : vector<1x128xf32> to vector<16x128xf32>
    %105 = arith.select %100, %102, %104 : vector<16x128xi1>, vector<16x128xf32>
    %106 = arith.mulf %93, %105 : vector<16x128xf32>
    %c0_22 = arith.constant 0 : index
    %c0_23 = arith.constant 0 : index
    %107 = vector.load %arg4[%c0_22, %c0_23] : memref<256x16xbf16, #tpu.memory_space<vmem>>, vector<256x16xbf16>
    %108 = arith.truncf %55 : vector<16x128xf32> to vector<16x128xbf16>
    %cst_24 = arith.constant dense<0.000000e+00> : vector<256x128xf32>
    %109 = tpu.matmul %107, %108, %cst_24 {dimension_numbers = #tpu.dot_dimension_numbers<[1], [0], [0], [1], [0, 0, 1, 1], [], []>} : vector<256x16xbf16>, vector<16x128xbf16>, vector<256x128xf32> -> vector<256x128xf32>
    %c0_25 = arith.constant 0 : index
    %c0_26 = arith.constant 0 : index
    %110 = vector.load %arg5[%c0_25, %c0_26] : memref<256x16xbf16, #tpu.memory_space<vmem>>, vector<256x16xbf16>
    %111 = arith.truncf %106 : vector<16x128xf32> to vector<16x128xbf16>
    %cst_27 = arith.constant dense<0.000000e+00> : vector<256x128xf32>
    %112 = tpu.matmul %110, %111, %cst_27 {dimension_numbers = #tpu.dot_dimension_numbers<[1], [0], [0], [1], [0, 0, 1, 1], [], []>} : vector<256x16xbf16>, vector<16x128xbf16>, vector<256x128xf32> -> vector<256x128xf32>
    %113 = arith.mulf %109, %112 : vector<256x128xf32>
    %c0_28 = arith.constant 0 : index
    %c0_29 = arith.constant 0 : index
    %114 = vector.load %arg6[%c0_28, %c0_29] : memref<768x256xbf16, #tpu.memory_space<vmem>>, vector<768x256xbf16>
    %115 = arith.truncf %113 : vector<256x128xf32> to vector<256x128xbf16>
    %cst_30 = arith.constant dense<0.000000e+00> : vector<768x128xf32>
    %116 = tpu.matmul %114, %115, %cst_30 {dimension_numbers = #tpu.dot_dimension_numbers<[1], [0], [0], [1], [0, 0, 1, 1], [], []>} : vector<768x256xbf16>, vector<256x128xbf16>, vector<768x128xf32> -> vector<768x128xf32>
    %117 = vector.extract_strided_slice %116 {offsets = [0, 0], sizes = [256, 128], strides = [1, 1]} : vector<768x128xf32> to vector<256x128xf32>
    %118 = arith.mulf %113, %117 : vector<256x128xf32>
    %cst_31 = arith.constant dense<0.000000e+00> : vector<128xf32>
    %119 = vector.multi_reduction <add>, %118, %cst_31 [0] : vector<256x128xf32> to vector<128xf32>
    %120 = vector.shape_cast %119 : vector<128xf32> to vector<1x128xf32>
    %121 = vector.extract_strided_slice %116 {offsets = [256, 0], sizes = [256, 128], strides = [1, 1]} : vector<768x128xf32> to vector<256x128xf32>
    %122 = arith.mulf %113, %121 : vector<256x128xf32>
    %cst_32 = arith.constant dense<0.000000e+00> : vector<128xf32>
    %123 = vector.multi_reduction <add>, %122, %cst_32 [0] : vector<256x128xf32> to vector<128xf32>
    %124 = vector.shape_cast %123 : vector<128xf32> to vector<1x128xf32>
    %125 = vector.extract_strided_slice %116 {offsets = [512, 0], sizes = [256, 128], strides = [1, 1]} : vector<768x128xf32> to vector<256x128xf32>
    %126 = arith.mulf %113, %125 : vector<256x128xf32>
    %cst_33 = arith.constant dense<0.000000e+00> : vector<128xf32>
    %127 = vector.multi_reduction <add>, %126, %cst_33 [0] : vector<256x128xf32> to vector<128xf32>
    %128 = vector.shape_cast %127 : vector<128xf32> to vector<1x128xf32>
    %129 = tpu.concatenate %120, %124, %128 in 0 : vector<1x128xf32>, vector<1x128xf32>, vector<1x128xf32> -> vector<3x128xf32>
    %c0_34 = arith.constant 0 : index
    %c0_35 = arith.constant 0 : index
    %130 = vector.load %arg7[%c0_34, %c0_35] : memref<3x128xf32, #tpu.memory_space<vmem>>, vector<3x128xf32>
    tpu.vector_store %arg7[%c0_34, %c0_35], %129 {strides = array<i32>} : memref<3x128xf32, #tpu.memory_space<vmem>>, vector<3x128xf32>,
    return
  }
  func.func @transform_0(%arg0: i32) -> (i32, i32) {
    %c0_i32 = arith.constant 0 : i32
    %c0_i32_0 = arith.constant 0 : i32
    return %c0_i32, %arg0 : i32, i32
  }
  func.func @transform_1(%arg0: i32) -> (i32, i32) {
    %c0_i32 = arith.constant 0 : i32
    %c0_i32_0 = arith.constant 0 : i32
    %c0_i32_1 = arith.constant 0 : i32
    return %c0_i32, %c0_i32_0 : i32, i32
  }
  func.func @transform_2(%arg0: i32) -> (i32, i32) {
    %c0_i32 = arith.constant 0 : i32
    %c0_i32_0 = arith.constant 0 : i32
    %c0_i32_1 = arith.constant 0 : i32
    return %c0_i32, %c0_i32_0 : i32, i32
  }
  func.func @transform_3(%arg0: i32) -> (i32, i32) {
    %c0_i32 = arith.constant 0 : i32
    %c0_i32_0 = arith.constant 0 : i32
    %c0_i32_1 = arith.constant 0 : i32
    return %c0_i32, %c0_i32_0 : i32, i32
  }
  func.func @transform_4(%arg0: i32) -> (i32, i32) {
    %c0_i32 = arith.constant 0 : i32
    %c0_i32_0 = arith.constant 0 : i32
    %c0_i32_1 = arith.constant 0 : i32
    return %c0_i32, %c0_i32_0 : i32, i32
  }
  func.func @transform_5(%arg0: i32) -> (i32, i32) {
    %c0_i32 = arith.constant 0 : i32
    %c0_i32_0 = arith.constant 0 : i32
    %c0_i32_1 = arith.constant 0 : i32
    return %c0_i32, %c0_i32_0 : i32, i32
  }
  func.func @transform_6(%arg0: i32) -> (i32, i32) {
    %c0_i32 = arith.constant 0 : i32
    %c0_i32_0 = arith.constant 0 : i32
    return %c0_i32, %arg0 : i32, i32
  }
}

</mosaic_0001>

<llo_original>
// kernel: tpu_custom_call.1
$region0: #{tpu_custom_call.1}
  #allocation0 [shape = 'u32[]', space=smem, size = 0x4, offset = 0x4, fixed_abs, tag = 'smem constant byte address 0x4 - core index']
  #allocation1 [shape = 'u32[144,128]{1,0:T(1,128)}', space=vmem, size = 0x12000, scoped, tag = 'internal scratch']
  %s0 = inlined_call_operand.vmem [shape: f32[8,128], index: 0, kind: input, shape index: {}]
  %s1 = inlined_call_operand.vmem [shape: f32[16,4], index: 1, kind: input, shape index: {}]
  %s2 = inlined_call_operand.vmem [shape: f32[16,4], index: 2, kind: input, shape index: {}]
  %s3 = inlined_call_operand.vmem [shape: bf16[256,16], index: 3, kind: input, shape index: {}]
  %s4 = inlined_call_operand.vmem [shape: bf16[256,16], index: 4, kind: input, shape index: {}]
  %s5 = inlined_call_operand.hbm [shape: bf16[768,256], index: 5, kind: input, shape index: {}]
  %s6 = inlined_call_operand.hbm [shape: f32[3,128], index: 6, kind: output, shape index: {}]
  %s7 = sld [smem:[#allocation0]]
  $region38: #{tpu_custom_call.1} parent=0
    _
  %s9 = ssub.s32 1, %s7
  %s10 = scalar_select 0, %s9, %s7
  $region1: #{tpu_custom_call.1} parent=0
    #allocation2 [shape = 'u8[393216]{0}', space=vmem, size = 0x60000, scoped, tag = 'input window, operand 5, single buffered']
    #allocation3 [shape = 's32[1]{0}', space=sflag, size = 0x4, scoped, tag = 'scoped memory for tpu_custom_call.1']
    #allocation4 [shape = 's32[1]{0}', space=sflag, size = 0x4, scoped, tag = 'scoped memory for tpu_custom_call.1']
    #allocation5 [shape = 'u8[2048]{0}', space=vmem, size = 0x800, scoped, tag = 'output window, operand 0, single buffered']
    %11 = vsyncpa [#allocation3], 0
    %12 = vsyncpa [#allocation4], 0
    // Predicated region
    $region2: #{tpu_custom_call.1} parent=1 // pred_check
      _
    $region3: #{tpu_custom_call.1} parent=1 // pred_check_branch
      %14 = sbr.rel (0) target = $region5
    $region4: #{tpu_custom_call.1} parent=1 // pred_region
      _
    $region5: #{tpu_custom_call.1} parent=1 // pred_fallthru
      _
    // Predicated region
    $region6: #{tpu_custom_call.1} parent=1 // pred_check
      _
    $region7: #{tpu_custom_call.1} parent=1 // pred_check_branch
      %16 = sbr.rel (0) target = $region9
    $region8: #{tpu_custom_call.1} parent=1 // pred_region
      _
    $region9: #{tpu_custom_call.1} parent=1 // pred_fallthru
      _
    // Predicated region
    $region10: #{tpu_custom_call.1} parent=1 // pred_check
      _
    $region11: #{tpu_custom_call.1} parent=1 // pred_check_branch
      %18 = sbr.rel (0) target = $region13
    $region12: #{tpu_custom_call.1} parent=1 // pred_region
      _
    $region13: #{tpu_custom_call.1} parent=1 // pred_fallthru
      _
    // Predicated region
    $region14: #{tpu_custom_call.1} parent=1 // pred_check
      _
    $region15: #{tpu_custom_call.1} parent=1 // pred_check_branch
      %20 = sbr.rel (0) target = $region17
    $region16: #{tpu_custom_call.1} parent=1 // pred_region
      _
    $region17: #{tpu_custom_call.1} parent=1 // pred_fallthru
      _
    // Predicated region
    $region18: #{tpu_custom_call.1} parent=1 // pred_check
      _
    $region19: #{tpu_custom_call.1} parent=1 // pred_check_branch
      %22 = sbr.rel (0) target = $region21
    $region20: #{tpu_custom_call.1} parent=1 // pred_region
      _
    $region21: #{tpu_custom_call.1} parent=1 // pred_fallthru
      _
    // Predicated region
    $region22: #{tpu_custom_call.1} parent=1 // pred_check
      _
    $region23: #{tpu_custom_call.1} parent=1 // pred_check_branch
      %24 = sbr.rel (0) target = $region25
    $region24: #{tpu_custom_call.1} parent=1 // pred_region
      %s26 = ssub.s32 12288, 12288
      %27 = vsyncadd [#allocation3], %s26
      %s28 = sshll.u32 [#allocation2], 4
      %s29 = int_to_ptr.vmem [resolvable:$true] %s28
      %34 = dma.hbm_to_vmem [thread:$0]  %s5, 12288, %s29, [#allocation3], 128, 128, 8
    $region25: #{tpu_custom_call.1} parent=1 // pred_fallthru
      _
    // Predicated region
    $region26: #{tpu_custom_call.1} parent=1 // pred_check
      _
    $region27: #{tpu_custom_call.1} parent=1 // pred_check_branch
      %36 = sbr.rel (0) target = $region29
    $region28: #{tpu_custom_call.1} parent=1 // pred_region
      %37 = dma.done [#allocation3], 12288
    $region29: #{tpu_custom_call.1} parent=1 // pred_fallthru
      _
    %v39 = vld [vmem:[%s0] sm:$0xff]
    %v40 = vmul.f32 %v39, 0.5
    %v41 = vand.u32 2147483647, %v40
    %vm42 = vcmp.le.f32.partialorder %v41, 0.7853982
    %vm43 = vcmp.lt.s32.totalorder %v40, 0
    %v44 = vand.u32 %v40, 2139095040
    %v45 = vshrl.u32 %v44, 23
    %v46 = vsub.s32 %v45, 127
    %v47 = vand.u32 2147483647, %v40
    %v48 = vand.u32 %v47, 8388607
    %v49 = vor.u32 %v48, 8388608
    %v50 = vsub.s32 0, %v49
    %v51 = vadd.s32 %v46, 1
    %vm52 = vcmp.gt.s32.totalorder %v51, 0
    %v53 = vsel %vm52, %v51, 0
    %v54 = vshrl.u32 %v53, 5
    %v55 = vand.u32 %v53, 31
    %v56 = vsub.s32 32, %v55
    %v57 = vshrl.u32 683565275, %v56
    %v58 = vshll.u32 683565275, %v55
    %v59 = vshrl.u32 2475754826, %v56
    %v60 = vor.u32 %v58, %v59
    %v61 = vshll.u32 2475754826, %v55
    %v62 = vshrl.u32 2131351028, %v56
    %v63 = vor.u32 %v61, %v62
    %v64 = vshll.u32 2131351028, %v55
    %v65 = vshrl.u32 2102212464, %v56
    %v66 = vor.u32 %v64, %v65
    %v67 = vshll.u32 2102212464, %v55
    %v68 = vshrl.u32 920167782, %v56
    %v69 = vor.u32 %v67, %v68
    %v70 = vshll.u32 920167782, %v55
    %v71 = vshrl.u32 1326507024, %v56
    %v72 = vor.u32 %v70, %v71
    %vm73 = vcmp.lt.s32.totalorder %v54, 1
    %vm74 = vcmp.lt.s32.totalorder %v54, 2
    %vm75 = vcmp.lt.s32.totalorder %v54, 3
    %vm76 = vcmp.lt.s32.totalorder %v54, 4
    %v77 = vsel %vm73, %v57, %v60
    %v78 = vsel %vm76, %v66, 2102212464
    %v79 = vsel %vm75, %v63, %v78
    %v80 = vsel %vm74, %v77, %v79
    %v81 = vsel %vm73, %v60, %v63
    %v82 = vsel %vm76, %v69, 920167782
    %v83 = vsel %vm75, %v66, %v82
    %v84 = vsel %vm74, %v81, %v83
    %v85 = vsel %vm73, %v63, %v66
    %v86 = vsel %vm76, %v72, 1326507024
    %v87 = vsel %vm75, %v69, %v86
    %v88 = vsel %vm74, %v85, %v87
    %v89 = vshll.u32 %v49, 8
    %v90 = vmul.u32.u64.compose %v89, %v88
    %v91 = vextract.low.u32 %v90
    %v92 = vextract.high.u32 %v90
    %v93 = vmul.u32.u64.compose %v89, %v84
    %v94 = vextract.low.u32 %v93
    %v95 = vextract.high.u32 %v93
    %v96 = vmul.u32 %v89, %v80
    %v97 = vadd.s32 %v92, %v94
    %vm98 = vc.u32 %v92, %v94
    %v99 = vadd.s32 %v95, 1
    %v100 = vsel %vm98, %v99, %v95
    %v101 = vadd.s32 %v96, %v100
    %v102 = vadd.s32 %v101, 536870912
    %v103 = vshrl.u32 %v102, 30
    %v104 = vshll.u32 %v103, 30
    %v105 = vsub.s32 %v101, %v104
    %vm106 = vcmp.lt.s32.totalorder %v105, 0
    %v107 = vsub.s32 0, %v105
    %v108 = vsel %vm106, %v107, %v105
    %v109 = vclz %v108
    %v110 = vsub.s32 %v109, 2
    %vm111 = vcmp.gt.s32.totalorder 0, %v110
    %v112 = vsel %vm111, 0, %v110
    %v113 = vsub.s32 32, %v112
    %v114 = vshll.u32 %v105, %v112
    %v115 = vshrl.u32 %v97, %v113
    %v116 = vor.u32 %v114, %v115
    %v117 = vsub.s32 4294967266, %v112
    %v118 = vadd.s32 %v117, 127
    %v119 = vshll.u32 %v118, 23
    %v120 = vor.u32 4788187, %v119
    %v121 = vand.u32 2147483647, %v120
    %v123 = vcvt.s32.f32 %v116
    %v124 = vmul.f32 %v123, %v121
    %v125 = vxor.u32 %v124, 2147483648
    %v126 = vsel %vm43, %v125, %v124
    %v127 = vsub.s32 4, %v103
    %v128 = vsel %vm43, %v127, %v103
    %v129 = vsel %vm42, %v40, %v126
    %v130 = vsel %vm42, 0, %v128
    %v131 = vcosq.f32.pop %v129
    %v132 = vsinq.f32.pop %v129
    %vm133 = vweird.f32 %v40
    %v134 = vand.u32 %v130, 3
    %vm135 = vcmp.lt.s32.totalorder %v134, 2
    %vm136 = vcmp.eq.s32.totalorder %v134, 0
    %v137 = vxor.u32 %v132, 2147483648
    %v138 = vsel %vm136, %v131, %v137
    %vm139 = vcmp.eq.s32.totalorder %v134, 2
    %v140 = vxor.u32 %v131, 2147483648
    %v141 = vsel %vm139, %v140, %v132
    %v142 = vsel %vm135, %v138, %v141
    %v143 = vsel %vm133, nan, %v142
    %v144 = vand.u32 2147483647, %v40
    %vm145 = vcmp.le.f32.partialorder %v144, 0.7853982
    %vm146 = vcmp.lt.s32.totalorder %v40, 0
    %v147 = vand.u32 %v40, 2139095040
    %v148 = vshrl.u32 %v147, 23
    %v149 = vsub.s32 %v148, 127
    %v150 = vand.u32 2147483647, %v40
    %v151 = vand.u32 %v150, 8388607
    %v152 = vor.u32 %v151, 8388608
    %v153 = vsub.s32 0, %v152
    %v154 = vadd.s32 %v149, 1
    %vm155 = vcmp.gt.s32.totalorder %v154, 0
    %v156 = vsel %vm155, %v154, 0
    %v157 = vshrl.u32 %v156, 5
    %v158 = vand.u32 %v156, 31
    %v159 = vsub.s32 32, %v158
    %v160 = vshrl.u32 683565275, %v159
    %v161 = vshll.u32 683565275, %v158
    %v162 = vshrl.u32 2475754826, %v159
    %v163 = vor.u32 %v161, %v162
    %v164 = vshll.u32 2475754826, %v158
    %v165 = vshrl.u32 2131351028, %v159
    %v166 = vor.u32 %v164, %v165
    %v167 = vshll.u32 2131351028, %v158
    %v168 = vshrl.u32 2102212464, %v159
    %v169 = vor.u32 %v167, %v168
    %v170 = vshll.u32 2102212464, %v158
    %v171 = vshrl.u32 920167782, %v159
    %v172 = vor.u32 %v170, %v171
    %v173 = vshll.u32 920167782, %v158
    %v174 = vshrl.u32 1326507024, %v159
    %v175 = vor.u32 %v173, %v174
    %vm176 = vcmp.lt.s32.totalorder %v157, 1
    %vm177 = vcmp.lt.s32.totalorder %v157, 2
    %vm178 = vcmp.lt.s32.totalorder %v157, 3
    %vm179 = vcmp.lt.s32.totalorder %v157, 4
    %v180 = vsel %vm176, %v160, %v163
    %v181 = vsel %vm179, %v169, 2102212464
    %v182 = vsel %vm178, %v166, %v181
    %v183 = vsel %vm177, %v180, %v182
    %v184 = vsel %vm176, %v163, %v166
    %v185 = vsel %vm179, %v172, 920167782
    %v186 = vsel %vm178, %v169, %v185
    %v187 = vsel %vm177, %v184, %v186
    %v188 = vsel %vm176, %v166, %v169
    %v189 = vsel %vm179, %v175, 1326507024
    %v190 = vsel %vm178, %v172, %v189
    %v191 = vsel %vm177, %v188, %v190
    %v192 = vshll.u32 %v152, 8
    %v193 = vmul.u32.u64.compose %v192, %v191
    %v194 = vextract.low.u32 %v193
    %v195 = vextract.high.u32 %v193
    %v196 = vmul.u32.u64.compose %v192, %v187
    %v197 = vextract.low.u32 %v196
    %v198 = vextract.high.u32 %v196
    %v199 = vmul.u32 %v192, %v183
    %v200 = vadd.s32 %v195, %v197
    %vm201 = vc.u32 %v195, %v197
    %v202 = vadd.s32 %v198, 1
    %v203 = vsel %vm201, %v202, %v198
    %v204 = vadd.s32 %v199, %v203
    %v205 = vadd.s32 %v204, 536870912
    %v206 = vshrl.u32 %v205, 30
    %v207 = vshll.u32 %v206, 30
    %v208 = vsub.s32 %v204, %v207
    %vm209 = vcmp.lt.s32.totalorder %v208, 0
    %v210 = vsub.s32 0, %v208
    %v211 = vsel %vm209, %v210, %v208
    %v212 = vclz %v211
    %v213 = vsub.s32 %v212, 2
    %vm214 = vcmp.gt.s32.totalorder 0, %v213
    %v215 = vsel %vm214, 0, %v213
    %v216 = vsub.s32 32, %v215
    %v217 = vshll.u32 %v208, %v215
    %v218 = vshrl.u32 %v200, %v216
    %v219 = vor.u32 %v217, %v218
    %v220 = vsub.s32 4294967266, %v215
    %v221 = vadd.s32 %v220, 127
    %v222 = vshll.u32 %v221, 23
    %v223 = vor.u32 4788187, %v222
    %v224 = vand.u32 2147483647, %v223
    %v226 = vcvt.s32.f32 %v219
    %v227 = vmul.f32 %v226, %v224
    %v228 = vxor.u32 %v227, 2147483648
    %v229 = vsel %vm146, %v228, %v227
    %v230 = vsub.s32 4, %v206
    %v231 = vsel %vm146, %v230, %v206
    %v232 = vsel %vm145, %v40, %v229
    %v233 = vsel %vm145, 0, %v231
    %v234 = vcosq.f32.pop %v232
    %v235 = vsinq.f32.pop %v232
    %vm236 = vweird.f32 %v40
    %v237 = vadd.s32 %v233, 3
    %v238 = vand.u32 %v237, 3
    %vm239 = vcmp.lt.s32.totalorder %v238, 2
    %vm240 = vcmp.eq.s32.totalorder %v238, 0
    %v241 = vxor.u32 %v235, 2147483648
    %v242 = vsel %vm240, %v234, %v241
    %vm243 = vcmp.eq.s32.totalorder %v238, 2
    %v244 = vxor.u32 %v234, 2147483648
    %v245 = vsel %vm243, %v244, %v235
    %v246 = vsel %vm239, %v242, %v245
    %v247 = vsel %vm236, nan, %v246
    %v248 = vld [vmem:[%s1] sm:$0xff]
    %v249 = vld [vmem:[%s1 + $0x8] sm:$0xff]
    %vm250 = vcmp.gt.f32.partialorder %v248, 0.5
    %vm251 = vcmp.gt.f32.partialorder %v249, 0.5
    %v252 = vsel %vm250, 1, 0
    %v253 = vsel %vm251, 1, 0
    %254 = vset.pattern.permute.xlu0 0
    %255 = vperm.xlu0 %254, %v252
    %v256 = vpop.permute.xlu0 %255
    %257 = vset.pattern.permute.xlu0 0
    %258 = vperm.xlu0 %257, %v253
    %v259 = vpop.permute.xlu0 %258
    %vm260 = vcmp.eq.s32.totalorder %v256, 1
    %vm261 = vcmp.eq.s32.totalorder %v259, 1
    %v262 = vlaneseq
    %v263 = vshrl.u32 %v262, 7
    %v264 = vsub.s32 0, %v263
    %v265 = vrot.slane %v247, %v264
    %v266 = vlaneseq
    %v267 = vshrl.u32 %v266, 7
    %v268 = vsub.s32 0, %v267
    %v269 = vrot.slane %v143, %v268
    %v270 = vsel %vm260, %v265, %v269
    %v271 = vsel %vm261, %v265, %v269
    %272 = vset.pattern.permute.xlu0 1
    %273 = vperm.xlu0 %272, %v252
    %v274 = vpop.permute.xlu0 %273
    %275 = vset.pattern.permute.xlu0 1
    %276 = vperm.xlu0 %275, %v253
    %v277 = vpop.permute.xlu0 %276
    %vm278 = vcmp.eq.s32.totalorder %v274, 1
    %vm279 = vcmp.eq.s32.totalorder %v277, 1
    %v280 = vlaneseq
    %v281 = vshrl.u32 %v280, 7
    %v282 = vsub.s32 1, %v281
    %v283 = vrot.slane %v247, %v282
    %v284 = vlaneseq
    %v285 = vshrl.u32 %v284, 7
    %v286 = vsub.s32 1, %v285
    %v287 = vrot.slane %v143, %v286
    %v288 = vsel %vm278, %v283, %v287
    %v289 = vsel %vm279, %v283, %v287
    %v290 = vmul.f32 %v270, %v288
    %v291 = vmul.f32 %v271, %v289
    %292 = vset.pattern.permute.xlu0 2
    %293 = vperm.xlu0 %292, %v252
    %v294 = vpop.permute.xlu0 %293
    %295 = vset.pattern.permute.xlu0 2
    %296 = vperm.xlu0 %295, %v253
    %v297 = vpop.permute.xlu0 %296
    %vm298 = vcmp.eq.s32.totalorder %v294, 1
    %vm299 = vcmp.eq.s32.totalorder %v297, 1
    %v300 = vlaneseq
    %v301 = vshrl.u32 %v300, 7
    %v302 = vsub.s32 2, %v301
    %v303 = vrot.slane %v247, %v302
    %v304 = vlaneseq
    %v305 = vshrl.u32 %v304, 7
    %v306 = vsub.s32 2, %v305
    %v307 = vrot.slane %v143, %v306
    %v308 = vsel %vm298, %v303, %v307
    %v309 = vsel %vm299, %v303, %v307
    %v310 = vmul.f32 %v290, %v308
    %v311 = vmul.f32 %v291, %v309
    %312 = vset.pattern.permute.xlu0 3
    %313 = vperm.xlu0 %312, %v252
    %v314 = vpop.permute.xlu0 %313
    %315 = vset.pattern.permute.xlu0 3
    %316 = vperm.xlu0 %315, %v253
    %v317 = vpop.permute.xlu0 %316
    %vm318 = vcmp.eq.s32.totalorder %v314, 1
    %vm319 = vcmp.eq.s32.totalorder %v317, 1
    %v320 = vlaneseq
    %v321 = vshrl.u32 %v320, 7
    %v322 = vsub.s32 3, %v321
    %v323 = vrot.slane %v247, %v322
    %v324 = vlaneseq
    %v325 = vshrl.u32 %v324, 7
    %v326 = vsub.s32 3, %v325
    %v327 = vrot.slane %v143, %v326
    %v328 = vsel %vm318, %v323, %v327
    %v329 = vsel %vm319, %v323, %v327
    %v330 = vmul.f32 %v310, %v328
    %v331 = vmul.f32 %v311, %v329
    %v332 = vld [vmem:[%s2] sm:$0xff]
    %v333 = vld [vmem:[%s2 + $0x8] sm:$0xff]
    %vm334 = vcmp.gt.f32.partialorder %v332, 0.5
    %vm335 = vcmp.gt.f32.partialorder %v333, 0.5
    %v336 = vsel %vm334, 1, 0
    %v337 = vsel %vm335, 1, 0
    %338 = vset.pattern.permute.xlu0 0
    %339 = vperm.xlu0 %338, %v336
    %v340 = vpop.permute.xlu0 %339
    %341 = vset.pattern.permute.xlu0 0
    %342 = vperm.xlu0 %341, %v337
    %v343 = vpop.permute.xlu0 %342
    %vm344 = vcmp.eq.s32.totalorder %v340, 1
    %vm345 = vcmp.eq.s32.totalorder %v343, 1
    %v346 = vlaneseq
    %v347 = vshrl.u32 %v346, 7
    %v348 = vsub.s32 4, %v347
    %v349 = vrot.slane %v247, %v348
    %v350 = vlaneseq
    %v351 = vshrl.u32 %v350, 7
    %v352 = vsub.s32 4, %v351
    %v353 = vrot.slane %v143, %v352
    %v354 = vsel %vm344, %v349, %v353
    %v355 = vsel %vm345, %v349, %v353
    %356 = vset.pattern.permute.xlu0 1
    %357 = vperm.xlu0 %356, %v336
    %v358 = vpop.permute.xlu0 %357
    %359 = vset.pattern.permute.xlu0 1
    %360 = vperm.xlu0 %359, %v337
    %v361 = vpop.permute.xlu0 %360
    %vm362 = vcmp.eq.s32.totalorder %v358, 1
    %vm363 = vcmp.eq.s32.totalorder %v361, 1
    %v364 = vlaneseq
    %v365 = vshrl.u32 %v364, 7
    %v366 = vsub.s32 5, %v365
    %v367 = vrot.slane %v247, %v366
    %v368 = vlaneseq
    %v369 = vshrl.u32 %v368, 7
    %v370 = vsub.s32 5, %v369
    %v371 = vrot.slane %v143, %v370
    %v372 = vsel %vm362, %v367, %v371
    %v373 = vsel %vm363, %v367, %v371
    %v374 = vmul.f32 %v354, %v372
    %v375 = vmul.f32 %v355, %v373
    %376 = vset.pattern.permute.xlu0 2
    %377 = vperm.xlu0 %376, %v336
    %v378 = vpop.permute.xlu0 %377
    %379 = vset.pattern.permute.xlu0 2
    %380 = vperm.xlu0 %379, %v337
    %v381 = vpop.permute.xlu0 %380
    %vm382 = vcmp.eq.s32.totalorder %v378, 1
    %vm383 = vcmp.eq.s32.totalorder %v381, 1
    %v384 = vlaneseq
    %v385 = vshrl.u32 %v384, 7
    %v386 = vsub.s32 6, %v385
    %v387 = vrot.slane %v247, %v386
    %v388 = vlaneseq
    %v389 = vshrl.u32 %v388, 7
    %v390 = vsub.s32 6, %v389
    %v391 = vrot.slane %v143, %v390
    %v392 = vsel %vm382, %v387, %v391
    %v393 = vsel %vm383, %v387, %v391
    %v394 = vmul.f32 %v374, %v392
    %v395 = vmul.f32 %v375, %v393
    %396 = vset.pattern.permute.xlu0 3
    %397 = vperm.xlu0 %396, %v336
    %v398 = vpop.permute.xlu0 %397
    %399 = vset.pattern.permute.xlu0 3
    %400 = vperm.xlu0 %399, %v337
    %v401 = vpop.permute.xlu0 %400
    %vm402 = vcmp.eq.s32.totalorder %v398, 1
    %vm403 = vcmp.eq.s32.totalorder %v401, 1
    %v404 = vlaneseq
    %v405 = vshrl.u32 %v404, 7
    %v406 = vsub.s32 7, %v405
    %v407 = vrot.slane %v247, %v406
    %v408 = vlaneseq
    %v409 = vshrl.u32 %v408, 7
    %v410 = vsub.s32 7, %v409
    %v411 = vrot.slane %v143, %v410
    %v412 = vsel %vm402, %v407, %v411
    %v413 = vsel %vm403, %v407, %v411
    %v414 = vmul.f32 %v394, %v412
    %v415 = vmul.f32 %v395, %v413
    %v416 = vld [vmem:[%s3] sm:$0xf]
    %v417 = vld [vmem:[%s3 + $0x4] sm:$0xf]
    %v418 = vld [vmem:[%s3 + $0x8] sm:$0xf]
    %v419 = vld [vmem:[%s3 + $0xc] sm:$0xf]
    %v420 = vld [vmem:[%s3 + $0x10] sm:$0xf]
    %v421 = vld [vmem:[%s3 + $0x14] sm:$0xf]
    %v422 = vld [vmem:[%s3 + $0x18] sm:$0xf]
    %v423 = vld [vmem:[%s3 + $0x1c] sm:$0xf]
    %v424 = vld [vmem:[%s3 + $0x20] sm:$0xf]
    %v425 = vld [vmem:[%s3 + $0x24] sm:$0xf]
    %v426 = vld [vmem:[%s3 + $0x28] sm:$0xf]
    %v427 = vld [vmem:[%s3 + $0x2c] sm:$0xf]
    %v428 = vld [vmem:[%s3 + $0x30] sm:$0xf]
    %v429 = vld [vmem:[%s3 + $0x34] sm:$0xf]
    %v430 = vld [vmem:[%s3 + $0x38] sm:$0xf]
    %v431 = vld [vmem:[%s3 + $0x3c] sm:$0xf]
    %v432 = vld [vmem:[%s3 + $0x40] sm:$0xf]
    %v433 = vld [vmem:[%s3 + $0x44] sm:$0xf]
    %v434 = vld [vmem:[%s3 + $0x48] sm:$0xf]
    %v435 = vld [vmem:[%s3 + $0x4c] sm:$0xf]
    %v436 = vld [vmem:[%s3 + $0x50] sm:$0xf]
    %v437 = vld [vmem:[%s3 + $0x54] sm:$0xf]
    %v438 = vld [vmem:[%s3 + $0x58] sm:$0xf]
    %v439 = vld [vmem:[%s3 + $0x5c] sm:$0xf]
    %v440 = vld [vmem:[%s3 + $0x60] sm:$0xf]
    %v441 = vld [vmem:[%s3 + $0x64] sm:$0xf]
    %v442 = vld [vmem:[%s3 + $0x68] sm:$0xf]
    %v443 = vld [vmem:[%s3 + $0x6c] sm:$0xf]
    %v444 = vld [vmem:[%s3 + $0x70] sm:$0xf]
    %v445 = vld [vmem:[%s3 + $0x74] sm:$0xf]
    %v446 = vld [vmem:[%s3 + $0x78] sm:$0xf]
    %v447 = vld [vmem:[%s3 + $0x7c] sm:$0xf]
    %v448 = vpack.c.bf16 %v331, %v330
    %v481 = vunpack.c.l.b16 %v416
    %v482 = vunpack.c.l.b16 %v417
    %v483 = vunpack.c.l.b16 %v418
    %v484 = vunpack.c.l.b16 %v419
    %v485 = vunpack.c.l.b16 %v420
    %v486 = vunpack.c.l.b16 %v421
    %v487 = vunpack.c.l.b16 %v422
    %v488 = vunpack.c.l.b16 %v423
    %v489 = vunpack.c.l.b16 %v424
    %v490 = vunpack.c.l.b16 %v425
    %v491 = vunpack.c.l.b16 %v426
    %v492 = vunpack.c.l.b16 %v427
    %v493 = vunpack.c.l.b16 %v428
    %v494 = vunpack.c.l.b16 %v429
    %v495 = vunpack.c.l.b16 %v430
    %v496 = vunpack.c.l.b16 %v431
    %v497 = vunpack.c.l.b16 %v432
    %v498 = vunpack.c.l.b16 %v433
    %v499 = vunpack.c.l.b16 %v434
    %v500 = vunpack.c.l.b16 %v435
    %v501 = vunpack.c.l.b16 %v436
    %v502 = vunpack.c.l.b16 %v437
    %v503 = vunpack.c.l.b16 %v438
    %v504 = vunpack.c.l.b16 %v439
    %v505 = vunpack.c.l.b16 %v440
    %v506 = vunpack.c.l.b16 %v441
    %v507 = vunpack.c.l.b16 %v442
    %v508 = vunpack.c.l.b16 %v443
    %v509 = vunpack.c.l.b16 %v444
    %v510 = vunpack.c.l.b16 %v445
    %v511 = vunpack.c.l.b16 %v446
    %v512 = vunpack.c.l.b16 %v447
    %v513 = vpack.c.b16 %v482, %v481
    %v514 = vpack.c.b16 %v484, %v483
    %v515 = vpack.c.b16 %v486, %v485
    %v516 = vpack.c.b16 %v488, %v487
    %v517 = vpack.c.b16 %v490, %v489
    %v518 = vpack.c.b16 %v492, %v491
    %v519 = vpack.c.b16 %v494, %v493
    %v520 = vpack.c.b16 %v496, %v495
    %v521 = vpack.c.b16 %v498, %v497
    %v522 = vpack.c.b16 %v500, %v499
    %v523 = vpack.c.b16 %v502, %v501
    %v524 = vpack.c.b16 %v504, %v503
    %v525 = vpack.c.b16 %v506, %v505
    %v526 = vpack.c.b16 %v508, %v507
    %v527 = vpack.c.b16 %v510, %v509
    %v528 = vpack.c.b16 %v512, %v511
    %vm529 = vcmask 130048
    %v531 = vsel %vm529, %v513, 0
    %v534 = vsel %vm529, %v514, 0
    %v537 = vsel %vm529, %v515, 0
    %v540 = vsel %vm529, %v516, 0
    %v543 = vsel %vm529, %v517, 0
    %v546 = vsel %vm529, %v518, 0
    %v549 = vsel %vm529, %v519, 0
    %v552 = vsel %vm529, %v520, 0
    %v555 = vsel %vm529, %v521, 0
    %v558 = vsel %vm529, %v522, 0
    %v561 = vsel %vm529, %v523, 0
    %v564 = vsel %vm529, %v524, 0
    %v567 = vsel %vm529, %v525, 0
    %v570 = vsel %vm529, %v526, 0
    %v573 = vsel %vm529, %v527, 0
    %v576 = vsel %vm529, %v528, 0
    %578 = vmatprep.subr.bf16.mxu0 0
    %579 = vmatpush1.bf16.msra.mxu0 %v448
    %580 = vmatprep.subr.bf16.mxu0 0
    %581 = vmatpush1.bf16.msra.mxu0 0
    %582 = vmatprep.subr.bf16.mxu0 0
    %583 = vmatpush1.bf16.msra.mxu0 0
    %584 = vmatprep.subr.bf16.mxu0 0
    %585 = vmatpush1.bf16.msra.mxu0 0
    %586 = vmatprep.subr.bf16.mxu0 0
    %587 = vmatpush1.bf16.msra.mxu0 0
    %588 = vmatprep.subr.bf16.mxu0 0
    %589 = vmatpush1.bf16.msra.mxu0 0
    %590 = vmatprep.subr.bf16.mxu0 0
    %591 = vmatpush1.bf16.msra.mxu0 0
    %592 = vmatprep.subr.bf16.mxu0 0
    %593 = vmatpush1.bf16.msra.mxu0 0
    %594 = vmatprep.subr.bf16.mxu0 0
    %595 = vmatpush1.bf16.msra.mxu0 0
    %596 = vmatprep.subr.bf16.mxu0 0
    %597 = vmatpush1.bf16.msra.mxu0 0
    %598 = vmatprep.subr.bf16.mxu0 0
    %599 = vmatpush1.bf16.msra.mxu0 0
    %600 = vmatprep.subr.bf16.mxu0 0
    %601 = vmatpush1.bf16.msra.mxu0 0
    %602 = vmatprep.subr.bf16.mxu0 0
    %603 = vmatpush1.bf16.msra.mxu0 0
    %604 = vmatprep.subr.bf16.mxu0 0
    %605 = vmatpush1.bf16.msra.mxu0 0
    %606 = vmatprep.subr.bf16.mxu0 0
    %607 = vmatpush1.bf16.msra.mxu0 0
    %608 = vmatprep.subr.bf16.mxu0 0
    %609 = vmatpush1.bf16.msra.mxu0 0
    %610 = vmatprep.mubr.bf16.mxu0 0
    %611 = vmatmul.mubr.bf16.gmra.mrb[0].mxu0 %v531
    %v612 = vpop.f32.mrb[0].mxu0
    %v613 = vadd.f32 0.0, %v612
    %v614 = vpop.f32.mrb[0].mxu0
    %v615 = vpop.f32.mrb[0].mxu0
    %v616 = vadd.f32 0.0, %v615
    %v617 = vpop.f32.mrb[0].mxu0
    %618 = vmatprep.mubr.bf16.mxu0 0
    %619 = vmatmul.mubr.bf16.gmra.mrb[0].mxu0 %v534
    %v620 = vpop.f32.mrb[0].mxu0
    %v621 = vadd.f32 0.0, %v620
    %v622 = vpop.f32.mrb[0].mxu0
    %v623 = vpop.f32.mrb[0].mxu0
    %v624 = vadd.f32 0.0, %v623
    %v625 = vpop.f32.mrb[0].mxu0
    %626 = vmatprep.mubr.bf16.mxu0 0
    %627 = vmatmul.mubr.bf16.gmra.mrb[0].mxu0 %v537
    %v628 = vpop.f32.mrb[0].mxu0
    %v629 = vadd.f32 0.0, %v628
    %v630 = vpop.f32.mrb[0].mxu0
    %v631 = vpop.f32.mrb[0].mxu0
    %v632 = vadd.f32 0.0, %v631
    %v633 = vpop.f32.mrb[0].mxu0
    %634 = vmatprep.mubr.bf16.mxu0 0
    %635 = vmatmul.mubr.bf16.gmra.mrb[0].mxu0 %v540
    %v636 = vpop.f32.mrb[0].mxu0
    %v637 = vadd.f32 0.0, %v636
    %v638 = vpop.f32.mrb[0].mxu0
    %v639 = vpop.f32.mrb[0].mxu0
    %v640 = vadd.f32 0.0, %v639
    %v641 = vpop.f32.mrb[0].mxu0
    %642 = vmatprep.mubr.bf16.mxu0 0
    %643 = vmatmul.mubr.bf16.gmra.mrb[0].mxu0 %v543
    %v644 = vpop.f32.mrb[0].mxu0
    %v645 = vadd.f32 0.0, %v644
    %v646 = vpop.f32.mrb[0].mxu0
    %v647 = vpop.f32.mrb[0].mxu0
    %v648 = vadd.f32 0.0, %v647
    %v649 = vpop.f32.mrb[0].mxu0
    %650 = vmatprep.mubr.bf16.mxu0 0
    %651 = vmatmul.mubr.bf16.gmra.mrb[0].mxu0 %v546
    %v652 = vpop.f32.mrb[0].mxu0
    %v653 = vadd.f32 0.0, %v652
    %v654 = vpop.f32.mrb[0].mxu0
    %v655 = vpop.f32.mrb[0].mxu0
    %v656 = vadd.f32 0.0, %v655
    %v657 = vpop.f32.mrb[0].mxu0
    %658 = vmatprep.mubr.bf16.mxu0 0
    %659 = vmatmul.mubr.bf16.gmra.mrb[0].mxu0 %v549
    %v660 = vpop.f32.mrb[0].mxu0
    %v661 = vadd.f32 0.0, %v660
    %v662 = vpop.f32.mrb[0].mxu0
    %v663 = vpop.f32.mrb[0].mxu0
    %v664 = vadd.f32 0.0, %v663
    %v665 = vpop.f32.mrb[0].mxu0
    %666 = vmatprep.mubr.bf16.mxu0 0
    %667 = vmatmul.mubr.bf16.gmra.mrb[0].mxu0 %v552
    %v668 = vpop.f32.mrb[0].mxu0
    %v669 = vadd.f32 0.0, %v668
    %v670 = vpop.f32.mrb[0].mxu0
    %v671 = vpop.f32.mrb[0].mxu0
    %v672 = vadd.f32 0.0, %v671
    %v673 = vpop.f32.mrb[0].mxu0
    %674 = vmatprep.mubr.bf16.mxu0 0
    %675 = vmatmul.mubr.bf16.gmra.mrb[0].mxu0 %v555
    %v676 = vpop.f32.mrb[0].mxu0
    %v677 = vadd.f32 0.0, %v676
    %v678 = vpop.f32.mrb[0].mxu0
    %v679 = vpop.f32.mrb[0].mxu0
    %v680 = vadd.f32 0.0, %v679
    %v681 = vpop.f32.mrb[0].mxu0
    %682 = vmatprep.mubr.bf16.mxu0 0
    %683 = vmatmul.mubr.bf16.gmra.mrb[0].mxu0 %v558
    %v684 = vpop.f32.mrb[0].mxu0
    %v685 = vadd.f32 0.0, %v684
    %v686 = vpop.f32.mrb[0].mxu0
    %v687 = vpop.f32.mrb[0].mxu0
    %v688 = vadd.f32 0.0, %v687
    %v689 = vpop.f32.mrb[0].mxu0
    %690 = vmatprep.mubr.bf16.mxu0 0
    %691 = vmatmul.mubr.bf16.gmra.mrb[0].mxu0 %v561
    %v692 = vpop.f32.mrb[0].mxu0
    %v693 = vadd.f32 0.0, %v692
    %v694 = vpop.f32.mrb[0].mxu0
    %v695 = vpop.f32.mrb[0].mxu0
    %v696 = vadd.f32 0.0, %v695
    %v697 = vpop.f32.mrb[0].mxu0
    %698 = vmatprep.mubr.bf16.mxu0 0
    %699 = vmatmul.mubr.bf16.gmra.mrb[0].mxu0 %v564
    %v700 = vpop.f32.mrb[0].mxu0
    %v701 = vadd.f32 0.0, %v700
    %v702 = vpop.f32.mrb[0].mxu0
    %v703 = vpop.f32.mrb[0].mxu0
    %v704 = vadd.f32 0.0, %v703
    %v705 = vpop.f32.mrb[0].mxu0
    %706 = vmatprep.mubr.bf16.mxu0 0
    %707 = vmatmul.mubr.bf16.gmra.mrb[0].mxu0 %v567
    %v708 = vpop.f32.mrb[0].mxu0
    %v709 = vadd.f32 0.0, %v708
    %v710 = vpop.f32.mrb[0].mxu0
    %v711 = vpop.f32.mrb[0].mxu0
    %v712 = vadd.f32 0.0, %v711
    %v713 = vpop.f32.mrb[0].mxu0
    %714 = vmatprep.mubr.bf16.mxu0 0
    %715 = vmatmul.mubr.bf16.gmra.mrb[0].mxu0 %v570
    %v716 = vpop.f32.mrb[0].mxu0
    %v717 = vadd.f32 0.0, %v716
    %v718 = vpop.f32.mrb[0].mxu0
    %v719 = vpop.f32.mrb[0].mxu0
    %v720 = vadd.f32 0.0, %v719
    %v721 = vpop.f32.mrb[0].mxu0
    %722 = vmatprep.mubr.bf16.mxu0 0
    %723 = vmatmul.mubr.bf16.gmra.mrb[0].mxu0 %v573
    %v724 = vpop.f32.mrb[0].mxu0
    %v725 = vadd.f32 0.0, %v724
    %v726 = vpop.f32.mrb[0].mxu0
    %v727 = vpop.f32.mrb[0].mxu0
    %v728 = vadd.f32 0.0, %v727
    %v729 = vpop.f32.mrb[0].mxu0
    %730 = vmatprep.mubr.bf16.mxu0 0
    %731 = vmatmul.mubr.bf16.gmra.mrb[0].mxu0 %v576
    %v732 = vpop.f32.mrb[0].mxu0
    %v733 = vadd.f32 0.0, %v732
    %v734 = vpop.f32.mrb[0].mxu0
    %v735 = vpop.f32.mrb[0].mxu0
    %v736 = vadd.f32 0.0, %v735
    %v737 = vpop.f32.mrb[0].mxu0
    %738 = vdwg.mxu0
    %v739 = vld [vmem:[%s4] sm:$0xf]
    %v740 = vld [vmem:[%s4 + $0x4] sm:$0xf]
    %v741 = vld [vmem:[%s4 + $0x8] sm:$0xf]
    %v742 = vld [vmem:[%s4 + $0xc] sm:$0xf]
    %v743 = vld [vmem:[%s4 + $0x10] sm:$0xf]
    %v744 = vld [vmem:[%s4 + $0x14] sm:$0xf]
    %v745 = vld [vmem:[%s4 + $0x18] sm:$0xf]
    %v746 = vld [vmem:[%s4 + $0x1c] sm:$0xf]
    %v747 = vld [vmem:[%s4 + $0x20] sm:$0xf]
    %v748 = vld [vmem:[%s4 + $0x24] sm:$0xf]
    %v749 = vld [vmem:[%s4 + $0x28] sm:$0xf]
    %v750 = vld [vmem:[%s4 + $0x2c] sm:$0xf]
    %v751 = vld [vmem:[%s4 + $0x30] sm:$0xf]
    %v752 = vld [vmem:[%s4 + $0x34] sm:$0xf]
    %v753 = vld [vmem:[%s4 + $0x38] sm:$0xf]
    %v754 = vld [vmem:[%s4 + $0x3c] sm:$0xf]
    %v755 = vld [vmem:[%s4 + $0x40] sm:$0xf]
    %v756 = vld [vmem:[%s4 + $0x44] sm:$0xf]
    %v757 = vld [vmem:[%s4 + $0x48] sm:$0xf]
    %v758 = vld [vmem:[%s4 + $0x4c] sm:$0xf]
    %v759 = vld [vmem:[%s4 + $0x50] sm:$0xf]
    %v760 = vld [vmem:[%s4 + $0x54] sm:$0xf]
    %v761 = vld [vmem:[%s4 + $0x58] sm:$0xf]
    %v762 = vld [vmem:[%s4 + $0x5c] sm:$0xf]
    %v763 = vld [vmem:[%s4 + $0x60] sm:$0xf]
    %v764 = vld [vmem:[%s4 + $0x64] sm:$0xf]
    %v765 = vld [vmem:[%s4 + $0x68] sm:$0xf]
    %v766 = vld [vmem:[%s4 + $0x6c] sm:$0xf]
    %v767 = vld [vmem:[%s4 + $0x70] sm:$0xf]
    %v768 = vld [vmem:[%s4 + $0x74] sm:$0xf]
    %v769 = vld [vmem:[%s4 + $0x78] sm:$0xf]
    %v770 = vld [vmem:[%s4 + $0x7c] sm:$0xf]
    %v771 = vpack.c.bf16 %v415, %v414
    %v804 = vunpack.c.l.b16 %v739
    %v805 = vunpack.c.l.b16 %v740
    %v806 = vunpack.c.l.b16 %v741
    %v807 = vunpack.c.l.b16 %v742
    %v808 = vunpack.c.l.b16 %v743
    %v809 = vunpack.c.l.b16 %v744
    %v810 = vunpack.c.l.b16 %v745
    %v811 = vunpack.c.l.b16 %v746
    %v812 = vunpack.c.l.b16 %v747
    %v813 = vunpack.c.l.b16 %v748
    %v814 = vunpack.c.l.b16 %v749
    %v815 = vunpack.c.l.b16 %v750
    %v816 = vunpack.c.l.b16 %v751
    %v817 = vunpack.c.l.b16 %v752
    %v818 = vunpack.c.l.b16 %v753
    %v819 = vunpack.c.l.b16 %v754
    %v820 = vunpack.c.l.b16 %v755
    %v821 = vunpack.c.l.b16 %v756
    %v822 = vunpack.c.l.b16 %v757
    %v823 = vunpack.c.l.b16 %v758
    %v824 = vunpack.c.l.b16 %v759
    %v825 = vunpack.c.l.b16 %v760
    %v826 = vunpack.c.l.b16 %v761
    %v827 = vunpack.c.l.b16 %v762
    %v828 = vunpack.c.l.b16 %v763
    %v829 = vunpack.c.l.b16 %v764
    %v830 = vunpack.c.l.b16 %v765
    %v831 = vunpack.c.l.b16 %v766
    %v832 = vunpack.c.l.b16 %v767
    %v833 = vunpack.c.l.b16 %v768
    %v834 = vunpack.c.l.b16 %v769
    %v835 = vunpack.c.l.b16 %v770
    %v836 = vpack.c.b16 %v805, %v804
    %v837 = vpack.c.b16 %v807, %v806
    %v838 = vpack.c.b16 %v809, %v808
    %v839 = vpack.c.b16 %v811, %v810
    %v840 = vpack.c.b16 %v813, %v812
    %v841 = vpack.c.b16 %v815, %v814
    %v842 = vpack.c.b16 %v817, %v816
    %v843 = vpack.c.b16 %v819, %v818
    %v844 = vpack.c.b16 %v821, %v820
    %v845 = vpack.c.b16 %v823, %v822
    %v846 = vpack.c.b16 %v825, %v824
    %v847 = vpack.c.b16 %v827, %v826
    %v848 = vpack.c.b16 %v829, %v828
    %v849 = vpack.c.b16 %v831, %v830
    %v850 = vpack.c.b16 %v833, %v832
    %v851 = vpack.c.b16 %v835, %v834
    %v853 = vsel %vm529, %v836, 0
    %v856 = vsel %vm529, %v837, 0
    %v859 = vsel %vm529, %v838, 0
    %v862 = vsel %vm529, %v839, 0
    %v865 = vsel %vm529, %v840, 0
    %v868 = vsel %vm529, %v841, 0
    %v871 = vsel %vm529, %v842, 0
    %v874 = vsel %vm529, %v843, 0
    %v877 = vsel %vm529, %v844, 0
    %v880 = vsel %vm529, %v845, 0
    %v883 = vsel %vm529, %v846, 0
    %v886 = vsel %vm529, %v847, 0
    %v889 = vsel %vm529, %v848, 0
    %v892 = vsel %vm529, %v849, 0
    %v895 = vsel %vm529, %v850, 0
    %v898 = vsel %vm529, %v851, 0
    %900 = vmatprep.subr.bf16.mxu0 0
    %901 = vmatpush1.bf16.msra.mxu0 %v771
    %902 = vmatprep.subr.bf16.mxu0 0
    %903 = vmatpush1.bf16.msra.mxu0 0
    %904 = vmatprep.subr.bf16.mxu0 0
    %905 = vmatpush1.bf16.msra.mxu0 0
    %906 = vmatprep.subr.bf16.mxu0 0
    %907 = vmatpush1.bf16.msra.mxu0 0
    %908 = vmatprep.subr.bf16.mxu0 0
    %909 = vmatpush1.bf16.msra.mxu0 0
    %910 = vmatprep.subr.bf16.mxu0 0
    %911 = vmatpush1.bf16.msra.mxu0 0
    %912 = vmatprep.subr.bf16.mxu0 0
    %913 = vmatpush1.bf16.msra.mxu0 0
    %914 = vmatprep.subr.bf16.mxu0 0
    %915 = vmatpush1.bf16.msra.mxu0 0
    %916 = vmatprep.subr.bf16.mxu0 0
    %917 = vmatpush1.bf16.msra.mxu0 0
    %918 = vmatprep.subr.bf16.mxu0 0
    %919 = vmatpush1.bf16.msra.mxu0 0
    %920 = vmatprep.subr.bf16.mxu0 0
    %921 = vmatpush1.bf16.msra.mxu0 0
    %922 = vmatprep.subr.bf16.mxu0 0
    %923 = vmatpush1.bf16.msra.mxu0 0
    %924 = vmatprep.subr.bf16.mxu0 0
    %925 = vmatpush1.bf16.msra.mxu0 0
    %926 = vmatprep.subr.bf16.mxu0 0
    %927 = vmatpush1.bf16.msra.mxu0 0
    %928 = vmatprep.subr.bf16.mxu0 0
    %929 = vmatpush1.bf16.msra.mxu0 0
    %930 = vmatprep.subr.bf16.mxu0 0
    %931 = vmatpush1.bf16.msra.mxu0 0
    %932 = vmatprep.mubr.bf16.mxu0 0
    %933 = vmatmul.mubr.bf16.gmra.mrb[0].mxu0 %v853
    %v934 = vpop.f32.mrb[0].mxu0
    %v935 = vadd.f32 0.0, %v934
    %v936 = vpop.f32.mrb[0].mxu0
    %v937 = vpop.f32.mrb[0].mxu0
    %v938 = vadd.f32 0.0, %v937
    %v939 = vpop.f32.mrb[0].mxu0
    %940 = vmatprep.mubr.bf16.mxu0 0
    %941 = vmatmul.mubr.bf16.gmra.mrb[0].mxu0 %v856
    %v942 = vpop.f32.mrb[0].mxu0
    %v943 = vadd.f32 0.0, %v942
    %v944 = vpop.f32.mrb[0].mxu0
    %v945 = vpop.f32.mrb[0].mxu0
    %v946 = vadd.f32 0.0, %v945
    %v947 = vpop.f32.mrb[0].mxu0
    %948 = vmatprep.mubr.bf16.mxu0 0
    %949 = vmatmul.mubr.bf16.gmra.mrb[0].mxu0 %v859
    %v950 = vpop.f32.mrb[0].mxu0
    %v951 = vadd.f32 0.0, %v950
    %v952 = vpop.f32.mrb[0].mxu0
    %v953 = vpop.f32.mrb[0].mxu0
    %v954 = vadd.f32 0.0, %v953
    %v955 = vpop.f32.mrb[0].mxu0
    %956 = vmatprep.mubr.bf16.mxu0 0
    %957 = vmatmul.mubr.bf16.gmra.mrb[0].mxu0 %v862
    %v958 = vpop.f32.mrb[0].mxu0
    %v959 = vadd.f32 0.0, %v958
    %v960 = vpop.f32.mrb[0].mxu0
    %v961 = vpop.f32.mrb[0].mxu0
    %v962 = vadd.f32 0.0, %v961
    %v963 = vpop.f32.mrb[0].mxu0
    %964 = vmatprep.mubr.bf16.mxu0 0
    %965 = vmatmul.mubr.bf16.gmra.mrb[0].mxu0 %v865
    %v966 = vpop.f32.mrb[0].mxu0
    %v967 = vadd.f32 0.0, %v966
    %v968 = vpop.f32.mrb[0].mxu0
    %v969 = vpop.f32.mrb[0].mxu0
    %v970 = vadd.f32 0.0, %v969
    %v971 = vpop.f32.mrb[0].mxu0
    %972 = vmatprep.mubr.bf16.mxu0 0
    %973 = vmatmul.mubr.bf16.gmra.mrb[0].mxu0 %v868
    %v974 = vpop.f32.mrb[0].mxu0
    %v975 = vadd.f32 0.0, %v974
    %v976 = vpop.f32.mrb[0].mxu0
    %v977 = vpop.f32.mrb[0].mxu0
    %v978 = vadd.f32 0.0, %v977
    %v979 = vpop.f32.mrb[0].mxu0
    %980 = vmatprep.mubr.bf16.mxu0 0
    %981 = vmatmul.mubr.bf16.gmra.mrb[0].mxu0 %v871
    %v982 = vpop.f32.mrb[0].mxu0
    %v983 = vadd.f32 0.0, %v982
    %v984 = vpop.f32.mrb[0].mxu0
    %v985 = vpop.f32.mrb[0].mxu0
    %v986 = vadd.f32 0.0, %v985
    %v987 = vpop.f32.mrb[0].mxu0
    %988 = vmatprep.mubr.bf16.mxu0 0
    %989 = vmatmul.mubr.bf16.gmra.mrb[0].mxu0 %v874
    %v990 = vpop.f32.mrb[0].mxu0
    %v991 = vadd.f32 0.0, %v990
    %v992 = vpop.f32.mrb[0].mxu0
    %v993 = vpop.f32.mrb[0].mxu0
    %v994 = vadd.f32 0.0, %v993
    %v995 = vpop.f32.mrb[0].mxu0
    %996 = vmatprep.mubr.bf16.mxu0 0
    %997 = vmatmul.mubr.bf16.gmra.mrb[0].mxu0 %v877
    %v998 = vpop.f32.mrb[0].mxu0
    %v999 = vadd.f32 0.0, %v998
    %v1000 = vpop.f32.mrb[0].mxu0
    %v1001 = vpop.f32.mrb[0].mxu0
    %v1002 = vadd.f32 0.0, %v1001
    %v1003 = vpop.f32.mrb[0].mxu0
    %1004 = vmatprep.mubr.bf16.mxu0 0
    %1005 = vmatmul.mubr.bf16.gmra.mrb[0].mxu0 %v880
    %v1006 = vpop.f32.mrb[0].mxu0
    %v1007 = vadd.f32 0.0, %v1006
    %v1008 = vpop.f32.mrb[0].mxu0
    %v1009 = vpop.f32.mrb[0].mxu0
    %v1010 = vadd.f32 0.0, %v1009
    %v1011 = vpop.f32.mrb[0].mxu0
    %1012 = vmatprep.mubr.bf16.mxu0 0
    %1013 = vmatmul.mubr.bf16.gmra.mrb[0].mxu0 %v883
    %v1014 = vpop.f32.mrb[0].mxu0
    %v1015 = vadd.f32 0.0, %v1014
    %v1016 = vpop.f32.mrb[0].mxu0
    %v1017 = vpop.f32.mrb[0].mxu0
    %v1018 = vadd.f32 0.0, %v1017
    %v1019 = vpop.f32.mrb[0].mxu0
    %1020 = vmatprep.mubr.bf16.mxu0 0
    %1021 = vmatmul.mubr.bf16.gmra.mrb[0].mxu0 %v886
    %v1022 = vpop.f32.mrb[0].mxu0
    %v1023 = vadd.f32 0.0, %v1022
    %v1024 = vpop.f32.mrb[0].mxu0
    %v1025 = vpop.f32.mrb[0].mxu0
    %v1026 = vadd.f32 0.0, %v1025
    %v1027 = vpop.f32.mrb[0].mxu0
    %1028 = vmatprep.mubr.bf16.mxu0 0
    %1029 = vmatmul.mubr.bf16.gmra.mrb[0].mxu0 %v889
    %v1030 = vpop.f32.mrb[0].mxu0
    %v1031 = vadd.f32 0.0, %v1030
    %v1032 = vpop.f32.mrb[0].mxu0
    %v1033 = vpop.f32.mrb[0].mxu0
    %v1034 = vadd.f32 0.0, %v1033
    %v1035 = vpop.f32.mrb[0].mxu0
    %1036 = vmatprep.mubr.bf16.mxu0 0
    %1037 = vmatmul.mubr.bf16.gmra.mrb[0].mxu0 %v892
    %v1038 = vpop.f32.mrb[0].mxu0
    %v1039 = vadd.f32 0.0, %v1038
    %v1040 = vpop.f32.mrb[0].mxu0
    %v1041 = vpop.f32.mrb[0].mxu0
    %v1042 = vadd.f32 0.0, %v1041
    %v1043 = vpop.f32.mrb[0].mxu0
    %1044 = vmatprep.mubr.bf16.mxu0 0
    %1045 = vmatmul.mubr.bf16.gmra.mrb[0].mxu0 %v895
    %v1046 = vpop.f32.mrb[0].mxu0
    %v1047 = vadd.f32 0.0, %v1046
    %v1048 = vpop.f32.mrb[0].mxu0
    %v1049 = vpop.f32.mrb[0].mxu0
    %v1050 = vadd.f32 0.0, %v1049
    %v1051 = vpop.f32.mrb[0].mxu0
    %1052 = vmatprep.mubr.bf16.mxu0 0
    %1053 = vmatmul.mubr.bf16.gmra.mrb[0].mxu0 %v898
    %v1054 = vpop.f32.mrb[0].mxu0
    %v1055 = vadd.f32 0.0, %v1054
    %v1056 = vpop.f32.mrb[0].mxu0
    %v1057 = vpop.f32.mrb[0].mxu0
    %v1058 = vadd.f32 0.0, %v1057
    %v1059 = vpop.f32.mrb[0].mxu0
    %1060 = vdwg.mxu0
    %v1061 = vmul.f32 %v613, %v935
    %v1062 = vmul.f32 %v616, %v938
    %v1063 = vmul.f32 %v621, %v943
    %v1064 = vmul.f32 %v624, %v946
    %v1065 = vmul.f32 %v629, %v951
    %v1066 = vmul.f32 %v632, %v954
    %v1067 = vmul.f32 %v637, %v959
    %v1068 = vmul.f32 %v640, %v962
    %v1069 = vmul.f32 %v645, %v967
    %v1070 = vmul.f32 %v648, %v970
    %v1071 = vmul.f32 %v653, %v975
    %v1072 = vmul.f32 %v656, %v978
    %v1073 = vmul.f32 %v661, %v983
    %v1074 = vmul.f32 %v664, %v986
    %v1075 = vmul.f32 %v669, %v991
    %v1076 = vmul.f32 %v672, %v994
    %v1077 = vmul.f32 %v677, %v999
    %v1078 = vmul.f32 %v680, %v1002
    %v1079 = vmul.f32 %v685, %v1007
    %v1080 = vmul.f32 %v688, %v1010
    %v1081 = vmul.f32 %v693, %v1015
    %v1082 = vmul.f32 %v696, %v1018
    %v1083 = vmul.f32 %v701, %v1023
    %v1084 = vmul.f32 %v704, %v1026
    %v1085 = vmul.f32 %v709, %v1031
    %v1086 = vmul.f32 %v712, %v1034
    %v1087 = vmul.f32 %v717, %v1039
    %v1088 = vmul.f32 %v720, %v1042
    %v1089 = vmul.f32 %v725, %v1047
    %v1090 = vmul.f32 %v728, %v1050
    %v1091 = vmul.f32 %v733, %v1055
    %v1092 = vmul.f32 %v736, %v1058
    %v1093 = vld [vmem:[#allocation2] sm:$0xff]
    %v1094 = vld [vmem:[#allocation2 + $0x8] sm:$0xff]
    %v1095 = vld [vmem:[#allocation2 + $0x10] sm:$0xff]
    %v1096 = vld [vmem:[#allocation2 + $0x18] sm:$0xff]
    %v1097 = vld [vmem:[#allocation2 + $0x20] sm:$0xff]
    %v1098 = vld [vmem:[#allocation2 + $0x28] sm:$0xff]
    %v1099 = vld [vmem:[#allocation2 + $0x30] sm:$0xff]
    %v1100 = vld [vmem:[#allocation2 + $0x38] sm:$0xff]
    %v1101 = vld [vmem:[#allocation2 + $0x40] sm:$0xff]
    %v1102 = vld [vmem:[#allocation2 + $0x48] sm:$0xff]
    %v1103 = vld [vmem:[#allocation2 + $0x50] sm:$0xff]
    %v1104 = vld [vmem:[#allocation2 + $0x58] sm:$0xff]
    %v1105 = vld [vmem:[#allocation2 + $0x60] sm:$0xff]
    %v1106 = vld [vmem:[#allocation2 + $0x68] sm:$0xff]
    %v1107 = vld [vmem:[#allocation2 + $0x70] sm:$0xff]
    %v1108 = vld [vmem:[#allocation2 + $0x78] sm:$0xff]
    %v1109 = vld [vmem:[#allocation2 + $0x80] sm:$0xff]
    %v1110 = vld [vmem:[#allocation2 + $0x88] sm:$0xff]
    %v1111 = vld [vmem:[#allocation2 + $0x90] sm:$0xff]
    %v1112 = vld [vmem:[#allocation2 + $0x98] sm:$0xff]
    %v1113 = vld [vmem:[#allocation2 + $0xa0] sm:$0xff]
    %v1114 = vld [vmem:[#allocation2 + $0xa8] sm:$0xff]
    %v1115 = vld [vmem:[#allocation2 + $0xb0] sm:$0xff]
    %v1116 = vld [vmem:[#allocation2 + $0xb8] sm:$0xff]
    %v1117 = vld [vmem:[#allocation2 + $0xc0] sm:$0xff]
    %v1118 = vld [vmem:[#allocation2 + $0xc8] sm:$0xff]
    %v1119 = vld [vmem:[#allocation2 + $0xd0] sm:$0xff]
    %v1120 = vld [vmem:[#allocation2 + $0xd8] sm:$0xff]
    %v1121 = vld [vmem:[#allocation2 + $0xe0] sm:$0xff]
    %v1122 = vld [vmem:[#allocation2 + $0xe8] sm:$0xff]
    %v1123 = vld [vmem:[#allocation2 + $0xf0] sm:$0xff]
    %v1124 = vld [vmem:[#allocation2 + $0xf8] sm:$0xff]
    %v1125 = vld [vmem:[#allocation2 + $0x100] sm:$0xff]
    %v1126 = vld [vmem:[#allocation2 + $0x108] sm:$0xff]
    %v1127 = vld [vmem:[#allocation2 + $0x110] sm:$0xff]
    %v1128 = vld [vmem:[#allocation2 + $0x118] sm:$0xff]
    %v1129 = vld [vmem:[#allocation2 + $0x120] sm:$0xff]
    %v1130 = vld [vmem:[#allocation2 + $0x128] sm:$0xff]
    %v1131 = vld [vmem:[#allocation2 + $0x130] sm:$0xff]
    %v1132 = vld [vmem:[#allocation2 + $0x138] sm:$0xff]
    %v1133 = vld [vmem:[#allocation2 + $0x140] sm:$0xff]
    %v1134 = vld [vmem:[#allocation2 + $0x148] sm:$0xff]
    %v1135 = vld [vmem:[#allocation2 + $0x150] sm:$0xff]
    %v1136 = vld [vmem:[#allocation2 + $0x158] sm:$0xff]
    %v1137 = vld [vmem:[#allocation2 + $0x160] sm:$0xff]
    %v1138 = vld [vmem:[#allocation2 + $0x168] sm:$0xff]
    %v1139 = vld [vmem:[#allocation2 + $0x170] sm:$0xff]
    %v1140 = vld [vmem:[#allocation2 + $0x178] sm:$0xff]
    %v1141 = vld [vmem:[#allocation2 + $0x180] sm:$0xff]
    %v1142 = vld [vmem:[#allocation2 + $0x188] sm:$0xff]
    %v1143 = vld [vmem:[#allocation2 + $0x190] sm:$0xff]
    %v1144 = vld [vmem:[#allocation2 + $0x198] sm:$0xff]
    %v1145 = vld [vmem:[#allocation2 + $0x1a0] sm:$0xff]
    %v1146 = vld [vmem:[#allocation2 + $0x1a8] sm:$0xff]
    %v1147 = vld [vmem:[#allocation2 + $0x1b0] sm:$0xff]
    %v1148 = vld [vmem:[#allocation2 + $0x1b8] sm:$0xff]
    %v1149 = vld [vmem:[#allocation2 + $0x1c0] sm:$0xff]
    %v1150 = vld [vmem:[#allocation2 + $0x1c8] sm:$0xff]
    %v1151 = vld [vmem:[#allocation2 + $0x1d0] sm:$0xff]
    %v1152 = vld [vmem:[#allocation2 + $0x1d8] sm:$0xff]
    %v1153 = vld [vmem:[#allocation2 + $0x1e0] sm:$0xff]
    %v1154 = vld [vmem:[#allocation2 + $0x1e8] sm:$0xff]
    %v1155 = vld [vmem:[#allocation2 + $0x1f0] sm:$0xff]
    %v1156 = vld [vmem:[#allocation2 + $0x1f8] sm:$0xff]
    %v1157 = vld [vmem:[#allocation2 + $0x200] sm:$0xff]
    %v1158 = vld [vmem:[#allocation2 + $0x208] sm:$0xff]
    %v1159 = vld [vmem:[#allocation2 + $0x210] sm:$0xff]
    %v1160 = vld [vmem:[#allocation2 + $0x218] sm:$0xff]
    %v1161 = vld [vmem:[#allocation2 + $0x220] sm:$0xff]
    %v1162 = vld [vmem:[#allocation2 + $0x228] sm:$0xff]
    %v1163 = vld [vmem:[#allocation2 + $0x230] sm:$0xff]
    %v1164 = vld [vmem:[#allocation2 + $0x238] sm:$0xff]
    %v1165 = vld [vmem:[#allocation2 + $0x240] sm:$0xff]
    %v1166 = vld [vmem:[#allocation2 + $0x248] sm:$0xff]
    %v1167 = vld [vmem:[#allocation2 + $0x250] sm:$0xff]
    %v1168 = vld [vmem:[#allocation2 + $0x258] sm:$0xff]
    %v1169 = vld [vmem:[#allocation2 + $0x260] sm:$0xff]
    %v1170 = vld [vmem:[#allocation2 + $0x268] sm:$0xff]
    %v1171 = vld [vmem:[#allocation2 + $0x270] sm:$0xff]
    %v1172 = vld [vmem:[#allocation2 + $0x278] sm:$0xff]
    %v1173 = vld [vmem:[#allocation2 + $0x280] sm:$0xff]
    %v1174 = vld [vmem:[#allocation2 + $0x288] sm:$0xff]
    %v1175 = vld [vmem:[#allocation2 + $0x290] sm:$0xff]
    %v1176 = vld [vmem:[#allocation2 + $0x298] sm:$0xff]
    %v1177 = vld [vmem:[#allocation2 + $0x2a0] sm:$0xff]
    %v1178 = vld [vmem:[#allocation2 + $0x2a8] sm:$0xff]
    %v1179 = vld [vmem:[#allocation2 + $0x2b0] sm:$0xff]
    %v1180 = vld [vmem:[#allocation2 + $0x2b8] sm:$0xff]
    %v1181 = vld [vmem:[#allocation2 + $0x2c0] sm:$0xff]
    %v1182 = vld [vmem:[#allocation2 + $0x2c8] sm:$0xff]
    %v1183 = vld [vmem:[#allocation2 + $0x2d0] sm:$0xff]
    %v1184 = vld [vmem:[#allocation2 + $0x2d8] sm:$0xff]
    %v1185 = vld [vmem:[#allocation2 + $0x2e0] sm:$0xff]
    %v1186 = vld [vmem:[#allocation2 + $0x2e8] sm:$0xff]
    %v1187 = vld [vmem:[#allocation2 + $0x2f0] sm:$0xff]
    %v1188 = vld [vmem:[#allocation2 + $0x2f8] sm:$0xff]
    %v1189 = vpack.c.bf16 %v1062, %v1061
    %v1190 = vpack.c.bf16 %v1064, %v1063
    %v1191 = vpack.c.bf16 %v1066, %v1065
    %v1192 = vpack.c.bf16 %v1068, %v1067
    %v1193 = vpack.c.bf16 %v1070, %v1069
    %v1194 = vpack.c.bf16 %v1072, %v1071
    %v1195 = vpack.c.bf16 %v1074, %v1073
    %v1196 = vpack.c.bf16 %v1076, %v1075
    %v1197 = vpack.c.bf16 %v1078, %v1077
    %v1198 = vpack.c.bf16 %v1080, %v1079
    %v1199 = vpack.c.bf16 %v1082, %v1081
    %v1200 = vpack.c.bf16 %v1084, %v1083
    %v1201 = vpack.c.bf16 %v1086, %v1085
    %v1202 = vpack.c.bf16 %v1088, %v1087
    %v1203 = vpack.c.bf16 %v1090, %v1089
    %v1204 = vpack.c.bf16 %v1092, %v1091
    %v1301 = vunpack.c.l.b16 %v1093
    %v1302 = vunpack.c.h.b16 %v1093
    %v1303 = vunpack.c.l.b16 %v1094
    %v1304 = vunpack.c.h.b16 %v1094
    %v1305 = vunpack.c.l.b16 %v1095
    %v1306 = vunpack.c.h.b16 %v1095
    %v1307 = vunpack.c.l.b16 %v1096
    %v1308 = vunpack.c.h.b16 %v1096
    %v1309 = vunpack.c.l.b16 %v1097
    %v1310 = vunpack.c.h.b16 %v1097
    %v1311 = vunpack.c.l.b16 %v1098
    %v1312 = vunpack.c.h.b16 %v1098
    %v1313 = vunpack.c.l.b16 %v1099
    %v1314 = vunpack.c.h.b16 %v1099
    %v1315 = vunpack.c.l.b16 %v1100
    %v1316 = vunpack.c.h.b16 %v1100
    %v1317 = vunpack.c.l.b16 %v1101
    %v1318 = vunpack.c.h.b16 %v1101
    %v1319 = vunpack.c.l.b16 %v1102
    %v1320 = vunpack.c.h.b16 %v1102
    %v1321 = vunpack.c.l.b16 %v1103
    %v1322 = vunpack.c.h.b16 %v1103
    %v1323 = vunpack.c.l.b16 %v1104
    %v1324 = vunpack.c.h.b16 %v1104
    %v1325 = vunpack.c.l.b16 %v1105
    %v1326 = vunpack.c.h.b16 %v1105
    %v1327 = vunpack.c.l.b16 %v1106
    %v1328 = vunpack.c.h.b16 %v1106
    %v1329 = vunpack.c.l.b16 %v1107
    %v1330 = vunpack.c.h.b16 %v1107
    %v1331 = vunpack.c.l.b16 %v1108
    %v1332 = vunpack.c.h.b16 %v1108
    %v1333 = vunpack.c.l.b16 %v1109
    %v1334 = vunpack.c.h.b16 %v1109
    %v1335 = vunpack.c.l.b16 %v1110
    %v1336 = vunpack.c.h.b16 %v1110
    %v1337 = vunpack.c.l.b16 %v1111
    %v1338 = vunpack.c.h.b16 %v1111
    %v1339 = vunpack.c.l.b16 %v1112
    %v1340 = vunpack.c.h.b16 %v1112
    %v1341 = vunpack.c.l.b16 %v1113
    %v1342 = vunpack.c.h.b16 %v1113
    %v1343 = vunpack.c.l.b16 %v1114
    %v1344 = vunpack.c.h.b16 %v1114
    %v1345 = vunpack.c.l.b16 %v1115
    %v1346 = vunpack.c.h.b16 %v1115
    %v1347 = vunpack.c.l.b16 %v1116
    %v1348 = vunpack.c.h.b16 %v1116
    %v1349 = vunpack.c.l.b16 %v1117
    %v1350 = vunpack.c.h.b16 %v1117
    %v1351 = vunpack.c.l.b16 %v1118
    %v1352 = vunpack.c.h.b16 %v1118
    %v1353 = vunpack.c.l.b16 %v1119
    %v1354 = vunpack.c.h.b16 %v1119
    %v1355 = vunpack.c.l.b16 %v1120
    %v1356 = vunpack.c.h.b16 %v1120
    %v1357 = vunpack.c.l.b16 %v1121
    %v1358 = vunpack.c.h.b16 %v1121
    %v1359 = vunpack.c.l.b16 %v1122
    %v1360 = vunpack.c.h.b16 %v1122
    %v1361 = vunpack.c.l.b16 %v1123
    %v1362 = vunpack.c.h.b16 %v1123
    %v1363 = vunpack.c.l.b16 %v1124
    %v1364 = vunpack.c.h.b16 %v1124
    %v1365 = vunpack.c.l.b16 %v1125
    %v1366 = vunpack.c.h.b16 %v1125
    %v1367 = vunpack.c.l.b16 %v1126
    %v1368 = vunpack.c.h.b16 %v1126
    %v1369 = vunpack.c.l.b16 %v1127
    %v1370 = vunpack.c.h.b16 %v1127
    %v1371 = vunpack.c.l.b16 %v1128
    %v1372 = vunpack.c.h.b16 %v1128
    %v1373 = vunpack.c.l.b16 %v1129
    %v1374 = vunpack.c.h.b16 %v1129
    %v1375 = vunpack.c.l.b16 %v1130
    %v1376 = vunpack.c.h.b16 %v1130
    %v1377 = vunpack.c.l.b16 %v1131
    %v1378 = vunpack.c.h.b16 %v1131
    %v1379 = vunpack.c.l.b16 %v1132
    %v1380 = vunpack.c.h.b16 %v1132
    %v1381 = vunpack.c.l.b16 %v1133
    %v1382 = vunpack.c.h.b16 %v1133
    %v1383 = vunpack.c.l.b16 %v1134
    %v1384 = vunpack.c.h.b16 %v1134
    %v1385 = vunpack.c.l.b16 %v1135
    %v1386 = vunpack.c.h.b16 %v1135
    %v1387 = vunpack.c.l.b16 %v1136
    %v1388 = vunpack.c.h.b16 %v1136
    %v1389 = vunpack.c.l.b16 %v1137
    %v1390 = vunpack.c.h.b16 %v1137
    %v1391 = vunpack.c.l.b16 %v1138
    %v1392 = vunpack.c.h.b16 %v1138
    %v1393 = vunpack.c.l.b16 %v1139
    %v1394 = vunpack.c.h.b16 %v1139
    %v1395 = vunpack.c.l.b16 %v1140
    %v1396 = vunpack.c.h.b16 %v1140
    %v1397 = vunpack.c.l.b16 %v1141
    %v1398 = vunpack.c.h.b16 %v1141
    %v1399 = vunpack.c.l.b16 %v1142
    %v1400 = vunpack.c.h.b16 %v1142
    %v1401 = vunpack.c.l.b16 %v1143
    %v1402 = vunpack.c.h.b16 %v1143
    %v1403 = vunpack.c.l.b16 %v1144
    %v1404 = vunpack.c.h.b16 %v1144
    %v1405 = vunpack.c.l.b16 %v1145
    %v1406 = vunpack.c.h.b16 %v1145
    %v1407 = vunpack.c.l.b16 %v1146
    %v1408 = vunpack.c.h.b16 %v1146
    %v1409 = vunpack.c.l.b16 %v1147
    %v1410 = vunpack.c.h.b16 %v1147
    %v1411 = vunpack.c.l.b16 %v1148
    %v1412 = vunpack.c.h.b16 %v1148
    %v1413 = vunpack.c.l.b16 %v1149
    %v1414 = vunpack.c.h.b16 %v1149
    %v1415 = vunpack.c.l.b16 %v1150
    %v1416 = vunpack.c.h.b16 %v1150
    %v1417 = vunpack.c.l.b16 %v1151
    %v1418 = vunpack.c.h.b16 %v1151
    %v1419 = vunpack.c.l.b16 %v1152
    %v1420 = vunpack.c.h.b16 %v1152
    %v1421 = vunpack.c.l.b16 %v1153
    %v1422 = vunpack.c.h.b16 %v1153
    %v1423 = vunpack.c.l.b16 %v1154
    %v1424 = vunpack.c.h.b16 %v1154
    %v1425 = vunpack.c.l.b16 %v1155
    %v1426 = vunpack.c.h.b16 %v1155
    %v1427 = vunpack.c.l.b16 %v1156
    %v1428 = vunpack.c.h.b16 %v1156
    %v1429 = vunpack.c.l.b16 %v1157
    %v1430 = vunpack.c.h.b16 %v1157
    %v1431 = vunpack.c.l.b16 %v1158
    %v1432 = vunpack.c.h.b16 %v1158
    %v1433 = vunpack.c.l.b16 %v1159
    %v1434 = vunpack.c.h.b16 %v1159
    %v1435 = vunpack.c.l.b16 %v1160
    %v1436 = vunpack.c.h.b16 %v1160
    %v1437 = vunpack.c.l.b16 %v1161
    %v1438 = vunpack.c.h.b16 %v1161
    %v1439 = vunpack.c.l.b16 %v1162
    %v1440 = vunpack.c.h.b16 %v1162
    %v1441 = vunpack.c.l.b16 %v1163
    %v1442 = vunpack.c.h.b16 %v1163
    %v1443 = vunpack.c.l.b16 %v1164
    %v1444 = vunpack.c.h.b16 %v1164
    %v1445 = vunpack.c.l.b16 %v1165
    %v1446 = vunpack.c.h.b16 %v1165
    %v1447 = vunpack.c.l.b16 %v1166
    %v1448 = vunpack.c.h.b16 %v1166
    %v1449 = vunpack.c.l.b16 %v1167
    %v1450 = vunpack.c.h.b16 %v1167
    %v1451 = vunpack.c.l.b16 %v1168
    %v1452 = vunpack.c.h.b16 %v1168
    %v1453 = vunpack.c.l.b16 %v1169
    %v1454 = vunpack.c.h.b16 %v1169
    %v1455 = vunpack.c.l.b16 %v1170
    %v1456 = vunpack.c.h.b16 %v1170
    %v1457 = vunpack.c.l.b16 %v1171
    %v1458 = vunpack.c.h.b16 %v1171
    %v1459 = vunpack.c.l.b16 %v1172
    %v1460 = vunpack.c.h.b16 %v1172
    %v1461 = vunpack.c.l.b16 %v1173
    %v1462 = vunpack.c.h.b16 %v1173
    %v1463 = vunpack.c.l.b16 %v1174
    %v1464 = vunpack.c.h.b16 %v1174
    %v1465 = vunpack.c.l.b16 %v1175
    %v1466 = vunpack.c.h.b16 %v1175
    %v1467 = vunpack.c.l.b16 %v1176
    %v1468 = vunpack.c.h.b16 %v1176
    %v1469 = vunpack.c.l.b16 %v1177
    %v1470 = vunpack.c.h.b16 %v1177
    %v1471 = vunpack.c.l.b16 %v1178
    %v1472 = vunpack.c.h.b16 %v1178
    %v1473 = vunpack.c.l.b16 %v1179
    %v1474 = vunpack.c.h.b16 %v1179
    %v1475 = vunpack.c.l.b16 %v1180
    %v1476 = vunpack.c.h.b16 %v1180
    %v1477 = vunpack.c.l.b16 %v1181
    %v1478 = vunpack.c.h.b16 %v1181
    %v1479 = vunpack.c.l.b16 %v1182
    %v1480 = vunpack.c.h.b16 %v1182
    %v1481 = vunpack.c.l.b16 %v1183
    %v1482 = vunpack.c.h.b16 %v1183
    %v1483 = vunpack.c.l.b16 %v1184
    %v1484 = vunpack.c.h.b16 %v1184
    %v1485 = vunpack.c.l.b16 %v1185
    %v1486 = vunpack.c.h.b16 %v1185
    %v1487 = vunpack.c.l.b16 %v1186
    %v1488 = vunpack.c.h.b16 %v1186
    %v1489 = vunpack.c.l.b16 %v1187
    %v1490 = vunpack.c.h.b16 %v1187
    %v1491 = vunpack.c.l.b16 %v1188
    %v1492 = vunpack.c.h.b16 %v1188
    %v1493 = vpack.c.b16 %v1303, %v1301
    %v1494 = vpack.c.b16 %v1304, %v1302
    %v1495 = vpack.c.b16 %v1307, %v1305
    %v1496 = vpack.c.b16 %v1308, %v1306
    %v1497 = vpack.c.b16 %v1311, %v1309
    %v1498 = vpack.c.b16 %v1312, %v1310
    %v1499 = vpack.c.b16 %v1315, %v1313
    %v1500 = vpack.c.b16 %v1316, %v1314
    %v1501 = vpack.c.b16 %v1319, %v1317
    %v1502 = vpack.c.b16 %v1320, %v1318
    %v1503 = vpack.c.b16 %v1323, %v1321
    %v1504 = vpack.c.b16 %v1324, %v1322
    %v1505 = vpack.c.b16 %v1327, %v1325
    %v1506 = vpack.c.b16 %v1328, %v1326
    %v1507 = vpack.c.b16 %v1331, %v1329
    %v1508 = vpack.c.b16 %v1332, %v1330
    %v1509 = vpack.c.b16 %v1335, %v1333
    %v1510 = vpack.c.b16 %v1336, %v1334
    %v1511 = vpack.c.b16 %v1339, %v1337
    %v1512 = vpack.c.b16 %v1340, %v1338
    %v1513 = vpack.c.b16 %v1343, %v1341
    %v1514 = vpack.c.b16 %v1344, %v1342
    %v1515 = vpack.c.b16 %v1347, %v1345
    %v1516 = vpack.c.b16 %v1348, %v1346
    %v1517 = vpack.c.b16 %v1351, %v1349
    %v1518 = vpack.c.b16 %v1352, %v1350
    %v1519 = vpack.c.b16 %v1355, %v1353
    %v1520 = vpack.c.b16 %v1356, %v1354
    %v1521 = vpack.c.b16 %v1359, %v1357
    %v1522 = vpack.c.b16 %v1360, %v1358
    %v1523 = vpack.c.b16 %v1363, %v1361
    %v1524 = vpack.c.b16 %v1364, %v1362
    %v1525 = vpack.c.b16 %v1367, %v1365
    %v1526 = vpack.c.b16 %v1368, %v1366
    %v1527 = vpack.c.b16 %v1371, %v1369
    %v1528 = vpack.c.b16 %v1372, %v1370
    %v1529 = vpack.c.b16 %v1375, %v1373
    %v1530 = vpack.c.b16 %v1376, %v1374
    %v1531 = vpack.c.b16 %v1379, %v1377
    %v1532 = vpack.c.b16 %v1380, %v1378
    %v1533 = vpack.c.b16 %v1383, %v1381
    %v1534 = vpack.c.b16 %v1384, %v1382
    %v1535 = vpack.c.b16 %v1387, %v1385
    %v1536 = vpack.c.b16 %v1388, %v1386
    %v1537 = vpack.c.b16 %v1391, %v1389
    %v1538 = vpack.c.b16 %v1392, %v1390
    %v1539 = vpack.c.b16 %v1395, %v1393
    %v1540 = vpack.c.b16 %v1396, %v1394
    %v1541 = vpack.c.b16 %v1399, %v1397
    %v1542 = vpack.c.b16 %v1400, %v1398
    %v1543 = vpack.c.b16 %v1403, %v1401
    %v1544 = vpack.c.b16 %v1404, %v1402
    %v1545 = vpack.c.b16 %v1407, %v1405
    %v1546 = vpack.c.b16 %v1408, %v1406
    %v1547 = vpack.c.b16 %v1411, %v1409
    %v1548 = vpack.c.b16 %v1412, %v1410
    %v1549 = vpack.c.b16 %v1415, %v1413
    %v1550 = vpack.c.b16 %v1416, %v1414
    %v1551 = vpack.c.b16 %v1419, %v1417
    %v1552 = vpack.c.b16 %v1420, %v1418
    %v1553 = vpack.c.b16 %v1423, %v1421
    %v1554 = vpack.c.b16 %v1424, %v1422
    %v1555 = vpack.c.b16 %v1427, %v1425
    %v1556 = vpack.c.b16 %v1428, %v1426
    %v1557 = vpack.c.b16 %v1431, %v1429
    %v1558 = vpack.c.b16 %v1432, %v1430
    %v1559 = vpack.c.b16 %v1435, %v1433
    %v1560 = vpack.c.b16 %v1436, %v1434
    %v1561 = vpack.c.b16 %v1439, %v1437
    %v1562 = vpack.c.b16 %v1440, %v1438
    %v1563 = vpack.c.b16 %v1443, %v1441
    %v1564 = vpack.c.b16 %v1444, %v1442
    %v1565 = vpack.c.b16 %v1447, %v1445
    %v1566 = vpack.c.b16 %v1448, %v1446
    %v1567 = vpack.c.b16 %v1451, %v1449
    %v1568 = vpack.c.b16 %v1452, %v1450
    %v1569 = vpack.c.b16 %v1455, %v1453
    %v1570 = vpack.c.b16 %v1456, %v1454
    %v1571 = vpack.c.b16 %v1459, %v1457
    %v1572 = vpack.c.b16 %v1460, %v1458
    %v1573 = vpack.c.b16 %v1463, %v1461
    %v1574 = vpack.c.b16 %v1464, %v1462
    %v1575 = vpack.c.b16 %v1467, %v1465
    %v1576 = vpack.c.b16 %v1468, %v1466
    %v1577 = vpack.c.b16 %v1471, %v1469
    %v1578 = vpack.c.b16 %v1472, %v1470
    %v1579 = vpack.c.b16 %v1475, %v1473
    %v1580 = vpack.c.b16 %v1476, %v1474
    %v1581 = vpack.c.b16 %v1479, %v1477
    %v1582 = vpack.c.b16 %v1480, %v1478
    %v1583 = vpack.c.b16 %v1483, %v1481
    %v1584 = vpack.c.b16 %v1484, %v1482
    %v1585 = vpack.c.b16 %v1487, %v1485
    %v1586 = vpack.c.b16 %v1488, %v1486
    %v1587 = vpack.c.b16 %v1491, %v1489
    %v1588 = vpack.c.b16 %v1492, %v1490
    %1685 = vmatprep.subr.bf16.mxu0 0
    %1686 = vmatpush1.bf16.msra.mxu0 %v1189
    %1687 = vmatprep.subr.bf16.mxu0 0
    %1688 = vmatpush1.bf16.msra.mxu0 %v1190
    %1689 = vmatprep.subr.bf16.mxu0 0
    %1690 = vmatpush1.bf16.msra.mxu0 %v1191
    %1691 = vmatprep.subr.bf16.mxu0 0
    %1692 = vmatpush1.bf16.msra.mxu0 %v1192
    %1693 = vmatprep.subr.bf16.mxu0 0
    %1694 = vmatpush1.bf16.msra.mxu0 %v1193
    %1695 = vmatprep.subr.bf16.mxu0 0
    %1696 = vmatpush1.bf16.msra.mxu0 %v1194
    %1697 = vmatprep.subr.bf16.mxu0 0
    %1698 = vmatpush1.bf16.msra.mxu0 %v1195
    %1699 = vmatprep.subr.bf16.mxu0 0
    %1700 = vmatpush1.bf16.msra.mxu0 %v1196
    %1701 = vmatprep.subr.bf16.mxu0 0
    %1702 = vmatpush1.bf16.msra.mxu0 %v1197
    %1703 = vmatprep.subr.bf16.mxu0 0
    %1704 = vmatpush1.bf16.msra.mxu0 %v1198
    %1705 = vmatprep.subr.bf16.mxu0 0
    %1706 = vmatpush1.bf16.msra.mxu0 %v1199
    %1707 = vmatprep.subr.bf16.mxu0 0
    %1708 = vmatpush1.bf16.msra.mxu0 %v1200
    %1709 = vmatprep.subr.bf16.mxu0 0
    %1710 = vmatpush1.bf16.msra.mxu0 %v1201
    %1711 = vmatprep.subr.bf16.mxu0 0
    %1712 = vmatpush1.bf16.msra.mxu0 %v1202
    %1713 = vmatprep.subr.bf16.mxu0 0
    %1714 = vmatpush1.bf16.msra.mxu0 %v1203
    %1715 = vmatprep.subr.bf16.mxu0 0
    %1716 = vmatpush1.bf16.msra.mxu0 %v1204
    %1717 = vmatprep.mubr.bf16.mxu0 %v1494
    %1718 = vmatmul.mubr.bf16.gmra.mrb[0].mxu0 %v1493
    %v1719 = vpop.f32.mrb[0].mxu0
    %v1720 = vadd.f32 0.0, %v1719
    %v1721 = vpop.f32.mrb[0].mxu0
    %v1722 = vpop.f32.mrb[0].mxu0
    %v1723 = vadd.f32 0.0, %v1722
    %v1724 = vpop.f32.mrb[0].mxu0
    %1725 = vmatprep.mubr.bf16.mxu0 %v1496
    %1726 = vmatmul.mubr.bf16.gmra.mrb[0].mxu0 %v1495
    %v1727 = vpop.f32.mrb[0].mxu0
    %v1728 = vadd.f32 0.0, %v1727
    %v1729 = vpop.f32.mrb[0].mxu0
    %v1730 = vpop.f32.mrb[0].mxu0
    %v1731 = vadd.f32 0.0, %v1730
    %v1732 = vpop.f32.mrb[0].mxu0
    %1733 = vmatprep.mubr.bf16.mxu0 %v1498
    %1734 = vmatmul.mubr.bf16.gmra.mrb[0].mxu0 %v1497
    %v1735 = vpop.f32.mrb[0].mxu0
    %v1736 = vadd.f32 0.0, %v1735
    %v1737 = vpop.f32.mrb[0].mxu0
    %v1738 = vpop.f32.mrb[0].mxu0
    %v1739 = vadd.f32 0.0, %v1738
    %v1740 = vpop.f32.mrb[0].mxu0
    %1741 = vmatprep.mubr.bf16.mxu0 %v1500
    %1742 = vmatmul.mubr.bf16.gmra.mrb[0].mxu0 %v1499
    %v1743 = vpop.f32.mrb[0].mxu0
    %v1744 = vadd.f32 0.0, %v1743
    %v1745 = vpop.f32.mrb[0].mxu0
    %v1746 = vpop.f32.mrb[0].mxu0
    %v1747 = vadd.f32 0.0, %v1746
    %v1748 = vpop.f32.mrb[0].mxu0
    %1749 = vmatprep.mubr.bf16.mxu0 %v1502
    %1750 = vmatmul.mubr.bf16.gmra.mrb[0].mxu0 %v1501
    %v1751 = vpop.f32.mrb[0].mxu0
    %v1752 = vadd.f32 0.0, %v1751
    %v1753 = vpop.f32.mrb[0].mxu0
    %v1754 = vpop.f32.mrb[0].mxu0
    %v1755 = vadd.f32 0.0, %v1754
    %v1756 = vpop.f32.mrb[0].mxu0
    %1757 = vmatprep.mubr.bf16.mxu0 %v1504
    %1758 = vmatmul.mubr.bf16.gmra.mrb[0].mxu0 %v1503
    %v1759 = vpop.f32.mrb[0].mxu0
    %v1760 = vadd.f32 0.0, %v1759
    %v1761 = vpop.f32.mrb[0].mxu0
    %v1762 = vpop.f32.mrb[0].mxu0
    %v1763 = vadd.f32 0.0, %v1762
    %v1764 = vpop.f32.mrb[0].mxu0
    %1765 = vmatprep.mubr.bf16.mxu0 %v1506
    %1766 = vmatmul.mubr.bf16.gmra.mrb[0].mxu0 %v1505
    %v1767 = vpop.f32.mrb[0].mxu0
    %v1768 = vadd.f32 0.0, %v1767
    %v1769 = vpop.f32.mrb[0].mxu0
    %v1770 = vpop.f32.mrb[0].mxu0
    %v1771 = vadd.f32 0.0, %v1770
    %v1772 = vpop.f32.mrb[0].mxu0
    %1773 = vmatprep.mubr.bf16.mxu0 %v1508
    %1774 = vmatmul.mubr.bf16.gmra.mrb[0].mxu0 %v1507
    %v1775 = vpop.f32.mrb[0].mxu0
    %v1776 = vadd.f32 0.0, %v1775
    %v1777 = vpop.f32.mrb[0].mxu0
    %v1778 = vpop.f32.mrb[0].mxu0
    %v1779 = vadd.f32 0.0, %v1778
    %v1780 = vpop.f32.mrb[0].mxu0
    %1781 = vmatprep.mubr.bf16.mxu0 %v1510
    %1782 = vmatmul.mubr.bf16.gmra.mrb[0].mxu0 %v1509
    %v1783 = vpop.f32.mrb[0].mxu0
    %v1784 = vadd.f32 0.0, %v1783
    %v1785 = vpop.f32.mrb[0].mxu0
    %v1786 = vpop.f32.mrb[0].mxu0
    %v1787 = vadd.f32 0.0, %v1786
    %v1788 = vpop.f32.mrb[0].mxu0
    %1789 = vmatprep.mubr.bf16.mxu0 %v1512
    %1790 = vmatmul.mubr.bf16.gmra.mrb[0].mxu0 %v1511
    %v1791 = vpop.f32.mrb[0].mxu0
    %v1792 = vadd.f32 0.0, %v1791
    %v1793 = vpop.f32.mrb[0].mxu0
    %v1794 = vpop.f32.mrb[0].mxu0
    %v1795 = vadd.f32 0.0, %v1794
    %v1796 = vpop.f32.mrb[0].mxu0
    %1797 = vmatprep.mubr.bf16.mxu0 %v1514
    %1798 = vmatmul.mubr.bf16.gmra.mrb[0].mxu0 %v1513
    %v1799 = vpop.f32.mrb[0].mxu0
    %v1800 = vadd.f32 0.0, %v1799
    %v1801 = vpop.f32.mrb[0].mxu0
    %v1802 = vpop.f32.mrb[0].mxu0
    %v1803 = vadd.f32 0.0, %v1802
    %v1804 = vpop.f32.mrb[0].mxu0
    %1805 = vmatprep.mubr.bf16.mxu0 %v1516
    %1806 = vmatmul.mubr.bf16.gmra.mrb[0].mxu0 %v1515
    %v1807 = vpop.f32.mrb[0].mxu0
    %v1808 = vadd.f32 0.0, %v1807
    %v1809 = vpop.f32.mrb[0].mxu0
    %v1810 = vpop.f32.mrb[0].mxu0
    %v1811 = vadd.f32 0.0, %v1810
    %v1812 = vpop.f32.mrb[0].mxu0
    %1813 = vmatprep.mubr.bf16.mxu0 %v1518
    %1814 = vmatmul.mubr.bf16.gmra.mrb[0].mxu0 %v1517
    %v1815 = vpop.f32.mrb[0].mxu0
    %v1816 = vadd.f32 0.0, %v1815
    %v1817 = vpop.f32.mrb[0].mxu0
    %v1818 = vpop.f32.mrb[0].mxu0
    %v1819 = vadd.f32 0.0, %v1818
    %v1820 = vpop.f32.mrb[0].mxu0
    %1821 = vmatprep.mubr.bf16.mxu0 %v1520
    %1822 = vmatmul.mubr.bf16.gmra.mrb[0].mxu0 %v1519
    %v1823 = vpop.f32.mrb[0].mxu0
    %v1824 = vadd.f32 0.0, %v1823
    %v1825 = vpop.f32.mrb[0].mxu0
    %v1826 = vpop.f32.mrb[0].mxu0
    %v1827 = vadd.f32 0.0, %v1826
    %v1828 = vpop.f32.mrb[0].mxu0
    %1829 = vmatprep.mubr.bf16.mxu0 %v1522
    %1830 = vmatmul.mubr.bf16.gmra.mrb[0].mxu0 %v1521
    %v1831 = vpop.f32.mrb[0].mxu0
    %v1832 = vadd.f32 0.0, %v1831
    %v1833 = vpop.f32.mrb[0].mxu0
    %v1834 = vpop.f32.mrb[0].mxu0
    %v1835 = vadd.f32 0.0, %v1834
    %v1836 = vpop.f32.mrb[0].mxu0
    %1837 = vmatprep.mubr.bf16.mxu0 %v1524
    %1838 = vmatmul.mubr.bf16.gmra.mrb[0].mxu0 %v1523
    %v1839 = vpop.f32.mrb[0].mxu0
    %v1840 = vadd.f32 0.0, %v1839
    %v1841 = vpop.f32.mrb[0].mxu0
    %v1842 = vpop.f32.mrb[0].mxu0
    %v1843 = vadd.f32 0.0, %v1842
    %v1844 = vpop.f32.mrb[0].mxu0
    %1845 = vmatprep.mubr.bf16.mxu0 %v1526
    %1846 = vmatmul.mubr.bf16.gmra.mrb[0].mxu0 %v1525
    %v1847 = vpop.f32.mrb[0].mxu0
    %v1848 = vadd.f32 0.0, %v1847
    %v1849 = vpop.f32.mrb[0].mxu0
    %v1850 = vpop.f32.mrb[0].mxu0
    %v1851 = vadd.f32 0.0, %v1850
    %v1852 = vpop.f32.mrb[0].mxu0
    %1853 = vmatprep.mubr.bf16.mxu0 %v1528
    %1854 = vmatmul.mubr.bf16.gmra.mrb[0].mxu0 %v1527
    %v1855 = vpop.f32.mrb[0].mxu0
    %v1856 = vadd.f32 0.0, %v1855
    %v1857 = vpop.f32.mrb[0].mxu0
    %v1858 = vpop.f32.mrb[0].mxu0
    %v1859 = vadd.f32 0.0, %v1858
    %v1860 = vpop.f32.mrb[0].mxu0
    %1861 = vmatprep.mubr.bf16.mxu0 %v1530
    %1862 = vmatmul.mubr.bf16.gmra.mrb[0].mxu0 %v1529
    %v1863 = vpop.f32.mrb[0].mxu0
    %v1864 = vadd.f32 0.0, %v1863
    %v1865 = vpop.f32.mrb[0].mxu0
    %v1866 = vpop.f32.mrb[0].mxu0
    %v1867 = vadd.f32 0.0, %v1866
    %v1868 = vpop.f32.mrb[0].mxu0
    %1869 = vmatprep.mubr.bf16.mxu0 %v1532
    %1870 = vmatmul.mubr.bf16.gmra.mrb[0].mxu0 %v1531
    %v1871 = vpop.f32.mrb[0].mxu0
    %v1872 = vadd.f32 0.0, %v1871
    %v1873 = vpop.f32.mrb[0].mxu0
    %v1874 = vpop.f32.mrb[0].mxu0
    %v1875 = vadd.f32 0.0, %v1874
    %v1876 = vpop.f32.mrb[0].mxu0
    %1877 = vmatprep.mubr.bf16.mxu0 %v1534
    %1878 = vmatmul.mubr.bf16.gmra.mrb[0].mxu0 %v1533
    %v1879 = vpop.f32.mrb[0].mxu0
    %v1880 = vadd.f32 0.0, %v1879
    %v1881 = vpop.f32.mrb[0].mxu0
    %v1882 = vpop.f32.mrb[0].mxu0
    %v1883 = vadd.f32 0.0, %v1882
    %v1884 = vpop.f32.mrb[0].mxu0
    %1885 = vmatprep.mubr.bf16.mxu0 %v1536
    %1886 = vmatmul.mubr.bf16.gmra.mrb[0].mxu0 %v1535
    %v1887 = vpop.f32.mrb[0].mxu0
    %v1888 = vadd.f32 0.0, %v1887
    %v1889 = vpop.f32.mrb[0].mxu0
    %v1890 = vpop.f32.mrb[0].mxu0
    %v1891 = vadd.f32 0.0, %v1890
    %v1892 = vpop.f32.mrb[0].mxu0
    %1893 = vmatprep.mubr.bf16.mxu0 %v1538
    %1894 = vmatmul.mubr.bf16.gmra.mrb[0].mxu0 %v1537
    %v1895 = vpop.f32.mrb[0].mxu0
    %v1896 = vadd.f32 0.0, %v1895
    %v1897 = vpop.f32.mrb[0].mxu0
    %v1898 = vpop.f32.mrb[0].mxu0
    %v1899 = vadd.f32 0.0, %v1898
    %v1900 = vpop.f32.mrb[0].mxu0
    %1901 = vmatprep.mubr.bf16.mxu0 %v1540
    %1902 = vmatmul.mubr.bf16.gmra.mrb[0].mxu0 %v1539
    %v1903 = vpop.f32.mrb[0].mxu0
    %v1904 = vadd.f32 0.0, %v1903
    %v1905 = vpop.f32.mrb[0].mxu0
    %v1906 = vpop.f32.mrb[0].mxu0
    %v1907 = vadd.f32 0.0, %v1906
    %v1908 = vpop.f32.mrb[0].mxu0
    %1909 = vmatprep.mubr.bf16.mxu0 %v1542
    %1910 = vmatmul.mubr.bf16.gmra.mrb[0].mxu0 %v1541
    %v1911 = vpop.f32.mrb[0].mxu0
    %v1912 = vadd.f32 0.0, %v1911
    %v1913 = vpop.f32.mrb[0].mxu0
    %v1914 = vpop.f32.mrb[0].mxu0
    %v1915 = vadd.f32 0.0, %v1914
    %v1916 = vpop.f32.mrb[0].mxu0
    %1917 = vmatprep.mubr.bf16.mxu0 %v1544
    %1918 = vmatmul.mubr.bf16.gmra.mrb[0].mxu0 %v1543
    %v1919 = vpop.f32.mrb[0].mxu0
    %v1920 = vadd.f32 0.0, %v1919
    %v1921 = vpop.f32.mrb[0].mxu0
    %v1922 = vpop.f32.mrb[0].mxu0
    %v1923 = vadd.f32 0.0, %v1922
    %v1924 = vpop.f32.mrb[0].mxu0
    %1925 = vmatprep.mubr.bf16.mxu0 %v1546
    %1926 = vmatmul.mubr.bf16.gmra.mrb[0].mxu0 %v1545
    %v1927 = vpop.f32.mrb[0].mxu0
    %v1928 = vadd.f32 0.0, %v1927
    %v1929 = vpop.f32.mrb[0].mxu0
    %v1930 = vpop.f32.mrb[0].mxu0
    %v1931 = vadd.f32 0.0, %v1930
    %v1932 = vpop.f32.mrb[0].mxu0
    %1933 = vmatprep.mubr.bf16.mxu0 %v1548
    %1934 = vmatmul.mubr.bf16.gmra.mrb[0].mxu0 %v1547
    %v1935 = vpop.f32.mrb[0].mxu0
    %v1936 = vadd.f32 0.0, %v1935
    %v1937 = vpop.f32.mrb[0].mxu0
    %v1938 = vpop.f32.mrb[0].mxu0
    %v1939 = vadd.f32 0.0, %v1938
    %v1940 = vpop.f32.mrb[0].mxu0
    %1941 = vmatprep.mubr.bf16.mxu0 %v1550
    %1942 = vmatmul.mubr.bf16.gmra.mrb[0].mxu0 %v1549
    %v1943 = vpop.f32.mrb[0].mxu0
    %v1944 = vadd.f32 0.0, %v1943
    %v1945 = vpop.f32.mrb[0].mxu0
    %v1946 = vpop.f32.mrb[0].mxu0
    %v1947 = vadd.f32 0.0, %v1946
    %v1948 = vpop.f32.mrb[0].mxu0
    %1949 = vmatprep.mubr.bf16.mxu0 %v1552
    %1950 = vmatmul.mubr.bf16.gmra.mrb[0].mxu0 %v1551
    %v1951 = vpop.f32.mrb[0].mxu0
    %v1952 = vadd.f32 0.0, %v1951
    %v1953 = vpop.f32.mrb[0].mxu0
    %v1954 = vpop.f32.mrb[0].mxu0
    %v1955 = vadd.f32 0.0, %v1954
    %v1956 = vpop.f32.mrb[0].mxu0
    %1957 = vmatprep.mubr.bf16.mxu0 %v1554
    %1958 = vmatmul.mubr.bf16.gmra.mrb[0].mxu0 %v1553
    %v1959 = vpop.f32.mrb[0].mxu0
    %v1960 = vadd.f32 0.0, %v1959
    %v1961 = vpop.f32.mrb[0].mxu0
    %v1962 = vpop.f32.mrb[0].mxu0
    %v1963 = vadd.f32 0.0, %v1962
    %v1964 = vpop.f32.mrb[0].mxu0
    %1965 = vmatprep.mubr.bf16.mxu0 %v1556
    %1966 = vmatmul.mubr.bf16.gmra.mrb[0].mxu0 %v1555
    %v1967 = vpop.f32.mrb[0].mxu0
    %v1968 = vadd.f32 0.0, %v1967
    %v1969 = vpop.f32.mrb[0].mxu0
    %v1970 = vpop.f32.mrb[0].mxu0
    %v1971 = vadd.f32 0.0, %v1970
    %v1972 = vpop.f32.mrb[0].mxu0
    %1973 = vmatprep.mubr.bf16.mxu0 %v1558
    %1974 = vmatmul.mubr.bf16.gmra.mrb[0].mxu0 %v1557
    %v1975 = vpop.f32.mrb[0].mxu0
    %v1976 = vadd.f32 0.0, %v1975
    %v1977 = vpop.f32.mrb[0].mxu0
    %v1978 = vpop.f32.mrb[0].mxu0
    %v1979 = vadd.f32 0.0, %v1978
    %v1980 = vpop.f32.mrb[0].mxu0
    %1981 = vmatprep.mubr.bf16.mxu0 %v1560
    %1982 = vmatmul.mubr.bf16.gmra.mrb[0].mxu0 %v1559
    %v1983 = vpop.f32.mrb[0].mxu0
    %v1984 = vadd.f32 0.0, %v1983
    %v1985 = vpop.f32.mrb[0].mxu0
    %v1986 = vpop.f32.mrb[0].mxu0
    %v1987 = vadd.f32 0.0, %v1986
    %v1988 = vpop.f32.mrb[0].mxu0
    %1989 = vmatprep.mubr.bf16.mxu0 %v1562
    %1990 = vmatmul.mubr.bf16.gmra.mrb[0].mxu0 %v1561
    %v1991 = vpop.f32.mrb[0].mxu0
    %v1992 = vadd.f32 0.0, %v1991
    %v1993 = vpop.f32.mrb[0].mxu0
    %v1994 = vpop.f32.mrb[0].mxu0
    %v1995 = vadd.f32 0.0, %v1994
    %v1996 = vpop.f32.mrb[0].mxu0
    %1997 = vmatprep.mubr.bf16.mxu0 %v1564
    %1998 = vmatmul.mubr.bf16.gmra.mrb[0].mxu0 %v1563
    %v1999 = vpop.f32.mrb[0].mxu0
    %v2000 = vadd.f32 0.0, %v1999
    %v2001 = vpop.f32.mrb[0].mxu0
    %v2002 = vpop.f32.mrb[0].mxu0
    %v2003 = vadd.f32 0.0, %v2002
    %v2004 = vpop.f32.mrb[0].mxu0
    %2005 = vmatprep.mubr.bf16.mxu0 %v1566
    %2006 = vmatmul.mubr.bf16.gmra.mrb[0].mxu0 %v1565
    %v2007 = vpop.f32.mrb[0].mxu0
    %v2008 = vadd.f32 0.0, %v2007
    %v2009 = vpop.f32.mrb[0].mxu0
    %v2010 = vpop.f32.mrb[0].mxu0
    %v2011 = vadd.f32 0.0, %v2010
    %v2012 = vpop.f32.mrb[0].mxu0
    %2013 = vmatprep.mubr.bf16.mxu0 %v1568
    %2014 = vmatmul.mubr.bf16.gmra.mrb[0].mxu0 %v1567
    %v2015 = vpop.f32.mrb[0].mxu0
    %v2016 = vadd.f32 0.0, %v2015
    %v2017 = vpop.f32.mrb[0].mxu0
    %v2018 = vpop.f32.mrb[0].mxu0
    %v2019 = vadd.f32 0.0, %v2018
    %v2020 = vpop.f32.mrb[0].mxu0
    %2021 = vmatprep.mubr.bf16.mxu0 %v1570
    %2022 = vmatmul.mubr.bf16.gmra.mrb[0].mxu0 %v1569
    %v2023 = vpop.f32.mrb[0].mxu0
    %v2024 = vadd.f32 0.0, %v2023
    %v2025 = vpop.f32.mrb[0].mxu0
    %v2026 = vpop.f32.mrb[0].mxu0
    %v2027 = vadd.f32 0.0, %v2026
    %v2028 = vpop.f32.mrb[0].mxu0
    %2029 = vmatprep.mubr.bf16.mxu0 %v1572
    %2030 = vmatmul.mubr.bf16.gmra.mrb[0].mxu0 %v1571
    %v2031 = vpop.f32.mrb[0].mxu0
    %v2032 = vadd.f32 0.0, %v2031
    %v2033 = vpop.f32.mrb[0].mxu0
    %v2034 = vpop.f32.mrb[0].mxu0
    %v2035 = vadd.f32 0.0, %v2034
    %v2036 = vpop.f32.mrb[0].mxu0
    %2037 = vmatprep.mubr.bf16.mxu0 %v1574
    %2038 = vmatmul.mubr.bf16.gmra.mrb[0].mxu0 %v1573
    %v2039 = vpop.f32.mrb[0].mxu0
    %v2040 = vadd.f32 0.0, %v2039
    %v2041 = vpop.f32.mrb[0].mxu0
    %v2042 = vpop.f32.mrb[0].mxu0
    %v2043 = vadd.f32 0.0, %v2042
    %v2044 = vpop.f32.mrb[0].mxu0
    %2045 = vmatprep.mubr.bf16.mxu0 %v1576
    %2046 = vmatmul.mubr.bf16.gmra.mrb[0].mxu0 %v1575
    %v2047 = vpop.f32.mrb[0].mxu0
    %v2048 = vadd.f32 0.0, %v2047
    %v2049 = vpop.f32.mrb[0].mxu0
    %v2050 = vpop.f32.mrb[0].mxu0
    %v2051 = vadd.f32 0.0, %v2050
    %v2052 = vpop.f32.mrb[0].mxu0
    %2053 = vmatprep.mubr.bf16.mxu0 %v1578
    %2054 = vmatmul.mubr.bf16.gmra.mrb[0].mxu0 %v1577
    %v2055 = vpop.f32.mrb[0].mxu0
    %v2056 = vadd.f32 0.0, %v2055
    %v2057 = vpop.f32.mrb[0].mxu0
    %v2058 = vpop.f32.mrb[0].mxu0
    %v2059 = vadd.f32 0.0, %v2058
    %v2060 = vpop.f32.mrb[0].mxu0
    %2061 = vmatprep.mubr.bf16.mxu0 %v1580
    %2062 = vmatmul.mubr.bf16.gmra.mrb[0].mxu0 %v1579
    %v2063 = vpop.f32.mrb[0].mxu0
    %v2064 = vadd.f32 0.0, %v2063
    %v2065 = vpop.f32.mrb[0].mxu0
    %v2066 = vpop.f32.mrb[0].mxu0
    %v2067 = vadd.f32 0.0, %v2066
    %v2068 = vpop.f32.mrb[0].mxu0
    %2069 = vmatprep.mubr.bf16.mxu0 %v1582
    %2070 = vmatmul.mubr.bf16.gmra.mrb[0].mxu0 %v1581
    %v2071 = vpop.f32.mrb[0].mxu0
    %v2072 = vadd.f32 0.0, %v2071
    %v2073 = vpop.f32.mrb[0].mxu0
    %v2074 = vpop.f32.mrb[0].mxu0
    %v2075 = vadd.f32 0.0, %v2074
    %v2076 = vpop.f32.mrb[0].mxu0
    %2077 = vmatprep.mubr.bf16.mxu0 %v1584
    %2078 = vmatmul.mubr.bf16.gmra.mrb[0].mxu0 %v1583
    %v2079 = vpop.f32.mrb[0].mxu0
    %v2080 = vadd.f32 0.0, %v2079
    %v2081 = vpop.f32.mrb[0].mxu0
    %v2082 = vpop.f32.mrb[0].mxu0
    %v2083 = vadd.f32 0.0, %v2082
    %v2084 = vpop.f32.mrb[0].mxu0
    %2085 = vmatprep.mubr.bf16.mxu0 %v1586
    %2086 = vmatmul.mubr.bf16.gmra.mrb[0].mxu0 %v1585
    %v2087 = vpop.f32.mrb[0].mxu0
    %v2088 = vadd.f32 0.0, %v2087
    %v2089 = vpop.f32.mrb[0].mxu0
    %v2090 = vpop.f32.mrb[0].mxu0
    %v2091 = vadd.f32 0.0, %v2090
    %v2092 = vpop.f32.mrb[0].mxu0
    %2093 = vmatprep.mubr.bf16.mxu0 %v1588
    %2094 = vmatmul.mubr.bf16.gmra.mrb[0].mxu0 %v1587
    %v2095 = vpop.f32.mrb[0].mxu0
    %v2096 = vadd.f32 0.0, %v2095
    %v2097 = vpop.f32.mrb[0].mxu0
    %v2098 = vpop.f32.mrb[0].mxu0
    %v2099 = vadd.f32 0.0, %v2098
    %v2100 = vpop.f32.mrb[0].mxu0
    %2101 = vdwg.mxu0
    %v2102 = vmul.f32 %v1061, %v1720
    %v2103 = vmul.f32 %v1062, %v1723
    %v2104 = vmul.f32 %v1063, %v1728
    %v2105 = vmul.f32 %v1064, %v1731
    %v2106 = vmul.f32 %v1065, %v1736
    %v2107 = vmul.f32 %v1066, %v1739
    %v2108 = vmul.f32 %v1067, %v1744
    %v2109 = vmul.f32 %v1068, %v1747
    %v2110 = vmul.f32 %v1069, %v1752
    %v2111 = vmul.f32 %v1070, %v1755
    %v2112 = vmul.f32 %v1071, %v1760
    %v2113 = vmul.f32 %v1072, %v1763
    %v2114 = vmul.f32 %v1073, %v1768
    %v2115 = vmul.f32 %v1074, %v1771
    %v2116 = vmul.f32 %v1075, %v1776
    %v2117 = vmul.f32 %v1076, %v1779
    %v2118 = vmul.f32 %v1077, %v1784
    %v2119 = vmul.f32 %v1078, %v1787
    %v2120 = vmul.f32 %v1079, %v1792
    %v2121 = vmul.f32 %v1080, %v1795
    %v2122 = vmul.f32 %v1081, %v1800
    %v2123 = vmul.f32 %v1082, %v1803
    %v2124 = vmul.f32 %v1083, %v1808
    %v2125 = vmul.f32 %v1084, %v1811
    %v2126 = vmul.f32 %v1085, %v1816
    %v2127 = vmul.f32 %v1086, %v1819
    %v2128 = vmul.f32 %v1087, %v1824
    %v2129 = vmul.f32 %v1088, %v1827
    %v2130 = vmul.f32 %v1089, %v1832
    %v2131 = vmul.f32 %v1090, %v1835
    %v2132 = vmul.f32 %v1091, %v1840
    %v2133 = vmul.f32 %v1092, %v1843
    %v2134 = vadd.f32 %v2102, %v2103
    %v2135 = vadd.f32 %v2134, %v2104
    %v2136 = vadd.f32 %v2135, %v2105
    %v2137 = vadd.f32 %v2136, %v2106
    %v2138 = vadd.f32 %v2137, %v2107
    %v2139 = vadd.f32 %v2138, %v2108
    %v2140 = vadd.f32 %v2139, %v2109
    %v2141 = vadd.f32 %v2140, %v2110
    %v2142 = vadd.f32 %v2141, %v2111
    %v2143 = vadd.f32 %v2142, %v2112
    %v2144 = vadd.f32 %v2143, %v2113
    %v2145 = vadd.f32 %v2144, %v2114
    %v2146 = vadd.f32 %v2145, %v2115
    %v2147 = vadd.f32 %v2146, %v2116
    %v2148 = vadd.f32 %v2147, %v2117
    %v2149 = vadd.f32 %v2148, %v2118
    %v2150 = vadd.f32 %v2149, %v2119
    %v2151 = vadd.f32 %v2150, %v2120
    %v2152 = vadd.f32 %v2151, %v2121
    %v2153 = vadd.f32 %v2152, %v2122
    %v2154 = vadd.f32 %v2153, %v2123
    %v2155 = vadd.f32 %v2154, %v2124
    %v2156 = vadd.f32 %v2155, %v2125
    %v2157 = vadd.f32 %v2156, %v2126
    %v2158 = vadd.f32 %v2157, %v2127
    %v2159 = vadd.f32 %v2158, %v2128
    %v2160 = vadd.f32 %v2159, %v2129
    %v2161 = vadd.f32 %v2160, %v2130
    %v2162 = vadd.f32 %v2161, %v2131
    %v2163 = vadd.f32 %v2162, %v2132
    %v2164 = vadd.f32 %v2163, %v2133
    %v2165 = vrot.slane %v2164, 4
    %v2166 = vadd.f32 %v2164, %v2165
    %v2167 = vrot.slane %v2166, 2
    %v2168 = vadd.f32 %v2166, %v2167
    %v2169 = vrot.slane %v2168, 1
    %v2170 = vadd.f32 %v2168, %v2169
    %v2171 = vmul.f32 %v1061, %v1848
    %v2172 = vmul.f32 %v1062, %v1851
    %v2173 = vmul.f32 %v1063, %v1856
    %v2174 = vmul.f32 %v1064, %v1859
    %v2175 = vmul.f32 %v1065, %v1864
    %v2176 = vmul.f32 %v1066, %v1867
    %v2177 = vmul.f32 %v1067, %v1872
    %v2178 = vmul.f32 %v1068, %v1875
    %v2179 = vmul.f32 %v1069, %v1880
    %v2180 = vmul.f32 %v1070, %v1883
    %v2181 = vmul.f32 %v1071, %v1888
    %v2182 = vmul.f32 %v1072, %v1891
    %v2183 = vmul.f32 %v1073, %v1896
    %v2184 = vmul.f32 %v1074, %v1899
    %v2185 = vmul.f32 %v1075, %v1904
    %v2186 = vmul.f32 %v1076, %v1907
    %v2187 = vmul.f32 %v1077, %v1912
    %v2188 = vmul.f32 %v1078, %v1915
    %v2189 = vmul.f32 %v1079, %v1920
    %v2190 = vmul.f32 %v1080, %v1923
    %v2191 = vmul.f32 %v1081, %v1928
    %v2192 = vmul.f32 %v1082, %v1931
    %v2193 = vmul.f32 %v1083, %v1936
    %v2194 = vmul.f32 %v1084, %v1939
    %v2195 = vmul.f32 %v1085, %v1944
    %v2196 = vmul.f32 %v1086, %v1947
    %v2197 = vmul.f32 %v1087, %v1952
    %v2198 = vmul.f32 %v1088, %v1955
    %v2199 = vmul.f32 %v1089, %v1960
    %v2200 = vmul.f32 %v1090, %v1963
    %v2201 = vmul.f32 %v1091, %v1968
    %v2202 = vmul.f32 %v1092, %v1971
    %v2203 = vadd.f32 %v2171, %v2172
    %v2204 = vadd.f32 %v2203, %v2173
    %v2205 = vadd.f32 %v2204, %v2174
    %v2206 = vadd.f32 %v2205, %v2175
    %v2207 = vadd.f32 %v2206, %v2176
    %v2208 = vadd.f32 %v2207, %v2177
    %v2209 = vadd.f32 %v2208, %v2178
    %v2210 = vadd.f32 %v2209, %v2179
    %v2211 = vadd.f32 %v2210, %v2180
    %v2212 = vadd.f32 %v2211, %v2181
    %v2213 = vadd.f32 %v2212, %v2182
    %v2214 = vadd.f32 %v2213, %v2183
    %v2215 = vadd.f32 %v2214, %v2184
    %v2216 = vadd.f32 %v2215, %v2185
    %v2217 = vadd.f32 %v2216, %v2186
    %v2218 = vadd.f32 %v2217, %v2187
    %v2219 = vadd.f32 %v2218, %v2188
    %v2220 = vadd.f32 %v2219, %v2189
    %v2221 = vadd.f32 %v2220, %v2190
    %v2222 = vadd.f32 %v2221, %v2191
    %v2223 = vadd.f32 %v2222, %v2192
    %v2224 = vadd.f32 %v2223, %v2193
    %v2225 = vadd.f32 %v2224, %v2194
    %v2226 = vadd.f32 %v2225, %v2195
    %v2227 = vadd.f32 %v2226, %v2196
    %v2228 = vadd.f32 %v2227, %v2197
    %v2229 = vadd.f32 %v2228, %v2198
    %v2230 = vadd.f32 %v2229, %v2199
    %v2231 = vadd.f32 %v2230, %v2200
    %v2232 = vadd.f32 %v2231, %v2201
    %v2233 = vadd.f32 %v2232, %v2202
    %v2234 = vrot.slane %v2233, 4
    %v2235 = vadd.f32 %v2233, %v2234
    %v2236 = vrot.slane %v2235, 2
    %v2237 = vadd.f32 %v2235, %v2236
    %v2238 = vrot.slane %v2237, 1
    %v2239 = vadd.f32 %v2237, %v2238
    %v2240 = vmul.f32 %v1061, %v1976
    %v2241 = vmul.f32 %v1062, %v1979
    %v2242 = vmul.f32 %v1063, %v1984
    %v2243 = vmul.f32 %v1064, %v1987
    %v2244 = vmul.f32 %v1065, %v1992
    %v2245 = vmul.f32 %v1066, %v1995
    %v2246 = vmul.f32 %v1067, %v2000
    %v2247 = vmul.f32 %v1068, %v2003
    %v2248 = vmul.f32 %v1069, %v2008
    %v2249 = vmul.f32 %v1070, %v2011
    %v2250 = vmul.f32 %v1071, %v2016
    %v2251 = vmul.f32 %v1072, %v2019
    %v2252 = vmul.f32 %v1073, %v2024
    %v2253 = vmul.f32 %v1074, %v2027
    %v2254 = vmul.f32 %v1075, %v2032
    %v2255 = vmul.f32 %v1076, %v2035
    %v2256 = vmul.f32 %v1077, %v2040
    %v2257 = vmul.f32 %v1078, %v2043
    %v2258 = vmul.f32 %v1079, %v2048
    %v2259 = vmul.f32 %v1080, %v2051
    %v2260 = vmul.f32 %v1081, %v2056
    %v2261 = vmul.f32 %v1082, %v2059
    %v2262 = vmul.f32 %v1083, %v2064
    %v2263 = vmul.f32 %v1084, %v2067
    %v2264 = vmul.f32 %v1085, %v2072
    %v2265 = vmul.f32 %v1086, %v2075
    %v2266 = vmul.f32 %v1087, %v2080
    %v2267 = vmul.f32 %v1088, %v2083
    %v2268 = vmul.f32 %v1089, %v2088
    %v2269 = vmul.f32 %v1090, %v2091
    %v2270 = vmul.f32 %v1091, %v2096
    %v2271 = vmul.f32 %v1092, %v2099
    %v2272 = vadd.f32 %v2240, %v2241
    %v2273 = vadd.f32 %v2272, %v2242
    %v2274 = vadd.f32 %v2273, %v2243
    %v2275 = vadd.f32 %v2274, %v2244
    %v2276 = vadd.f32 %v2275, %v2245
    %v2277 = vadd.f32 %v2276, %v2246
    %v2278 = vadd.f32 %v2277, %v2247
    %v2279 = vadd.f32 %v2278, %v2248
    %v2280 = vadd.f32 %v2279, %v2249
    %v2281 = vadd.f32 %v2280, %v2250
    %v2282 = vadd.f32 %v2281, %v2251
    %v2283 = vadd.f32 %v2282, %v2252
    %v2284 = vadd.f32 %v2283, %v2253
    %v2285 = vadd.f32 %v2284, %v2254
    %v2286 = vadd.f32 %v2285, %v2255
    %v2287 = vadd.f32 %v2286, %v2256
    %v2288 = vadd.f32 %v2287, %v2257
    %v2289 = vadd.f32 %v2288, %v2258
    %v2290 = vadd.f32 %v2289, %v2259
    %v2291 = vadd.f32 %v2290, %v2260
    %v2292 = vadd.f32 %v2291, %v2261
    %v2293 = vadd.f32 %v2292, %v2262
    %v2294 = vadd.f32 %v2293, %v2263
    %v2295 = vadd.f32 %v2294, %v2264
    %v2296 = vadd.f32 %v2295, %v2265
    %v2297 = vadd.f32 %v2296, %v2266
    %v2298 = vadd.f32 %v2297, %v2267
    %v2299 = vadd.f32 %v2298, %v2268
    %v2300 = vadd.f32 %v2299, %v2269
    %v2301 = vadd.f32 %v2300, %v2270
    %v2302 = vadd.f32 %v2301, %v2271
    %v2303 = vrot.slane %v2302, 4
    %v2304 = vadd.f32 %v2302, %v2303
    %v2305 = vrot.slane %v2304, 2
    %v2306 = vadd.f32 %v2304, %v2305
    %v2307 = vrot.slane %v2306, 1
    %v2308 = vadd.f32 %v2306, %v2307
    %vm2309 = vcmask 1040384
    %v2310 = vsel %vm2309, %v2170, %v2239
    %vm2311 = vcmask 1041408
    %v2312 = vsel %vm2311, %v2310, %v2308
    %2313 = vst [vmem:[#allocation5] sm:$0x7] %v2312
    // Predicated region
    $region30: #{tpu_custom_call.1} parent=1 // pred_check
      _
    $region31: #{tpu_custom_call.1} parent=1 // pred_check_branch
      %2315 = sbr.rel (0) target = $region33
    $region32: #{tpu_custom_call.1} parent=1 // pred_region
      %s2317 = ssub.s32 64, 64
      %2318 = vsyncadd [#allocation4], %s2317
      %s2320 = sshll.u32 [#allocation5], 4
      %s2321 = int_to_ptr.vmem [resolvable:$true] %s2320
      %2323 = dma.vmem_to_hbm [thread:$0]  %s2321, 64, %s6, [#allocation4]
    $region33: #{tpu_custom_call.1} parent=1 // pred_fallthru
      _
    // Predicated region
    $region34: #{tpu_custom_call.1} parent=1 // pred_check
      _
    $region35: #{tpu_custom_call.1} parent=1 // pred_check_branch
      %2325 = sbr.rel (0) target = $region37
    $region36: #{tpu_custom_call.1} parent=1 // pred_region
      %2326 = dma.done [#allocation4], 64
    $region37: #{tpu_custom_call.1} parent=1 // pred_fallthru
      _
    %2327 = vsyncpa [#allocation3], 1
    %2328 = vsyncpa [#allocation4], 1

</llo_original>
